<compile_context>
chip_gen: v7x
topology: tpu7x:2x2x1
jax: 0.10.0
libtpu: 0.0.40
codegen_flags: <defaults>
</compile_context>

<pallas_src>
import jax
import jax.numpy as jnp
from jax.experimental import pallas as pl
from jax.experimental.pallas import tpu as pltpu


def _round_up(x, m):
    return ((x + m - 1) // m) * m


def _cdiv(a, b):
    return -(-a // b)


def _detect_hw():
    """Generation-aware tiling / scoped-VMEM budget (v7x has half the VMEM)."""
    vmem_cap = 128 * 1024 * 1024
    try:
        info = pltpu.get_tpu_info()
        vmem_cap = int(getattr(info, "vmem_capacity_bytes", vmem_cap) or vmem_cap)
    except Exception:
        pass
    if vmem_cap <= 64 * 1024 * 1024:       # v7x-class: 64 MiB / TensorCore
        return dict(vmem_limit=32 * 1024 * 1024, tm_lse=512, tm_vp=512, tv=512)
    # v5e / v6e: 128 MiB physical VMEM -> larger scoped limit and bigger tiles
    return dict(vmem_limit=96 * 1024 * 1024, tm_lse=1024, tm_vp=1024, tv=512)


_HW = _detect_hw()


def _row_tiling(m, tm_max, min_tiles=2):
    """Row tile: multiple of 8, <= tm_max, and (when m allows) >= min_tiles grid
    steps so megacore sharding (v7x, 2 TCs) has something to shard."""
    m8 = _round_up(max(m, 8), 8)
    tm = min(tm_max, m8)
    if m8 // tm < min_tiles and m8 >= min_tiles * 8:
        tm = _round_up(_cdiv(m8, min_tiles), 8)
    return tm, _cdiv(m, tm)


def _invariant_spec(shape, index_map):
    """BlockSpec for a grid-invariant block: single-buffer it (no point double
    buffering a block whose index never changes) when pipeline_mode exists."""
    if hasattr(pl, "Buffered"):
        try:
            return pl.BlockSpec(shape, index_map, pipeline_mode=pl.Buffered(1))
        except TypeError:
            pass
    return pl.BlockSpec(shape, index_map)


# --------------------------------------------------------------------------
# Fused vision-encoder + projector kernel (the (M, vision_dim) intermediate
# never touches HBM):
#   x (M, C*p*p) @ w_vis (C*p*p, Dv) + b_vis -> h  (stays in vregs)
#   h            @ w_proj (Dv, Dp)   + b_proj -> out (Dp = dim padded to 128)
# --------------------------------------------------------------------------
def _vis_proj_kernel(x_ref, wv_ref, bv_ref, wp_ref, bp_ref, o_ref):
    h = jnp.dot(x_ref[...], wv_ref[...], preferred_element_type=jnp.float32) + bv_ref[...]
    h = h.astype(wp_ref.dtype)
    o_ref[...] = (jnp.dot(h, wp_ref[...], preferred_element_type=jnp.float32)
                  + bp_ref[...]).astype(o_ref.dtype)


def vis_proj_pallas(x, w_vis, b_vis, w_proj_pad, b_proj_pad, *, tm_max, vmem_limit):
    """Fused (vision patch-embedding -> projector) for all image patches.

    Output is lane-dense: last dim is the 128-padded projector width; the
    caller slices the real `dim` columns back out.
    """
    M, Kp = x.shape
    Dv = w_vis.shape[1]
    Dop = w_proj_pad.shape[1]

    tm, num_mt = _row_tiling(M, tm_max)     # >= 2 tiles when M allows (v7x)

    return pl.pallas_call(
        _vis_proj_kernel,
        out_shape=jax.ShapeDtypeStruct((M, Dop), jnp.float32),
        grid=(num_mt,),
        in_specs=[
            pl.BlockSpec((tm, Kp), lambda i: (i, 0)),
            _invariant_spec((Kp, Dv), lambda i: (0, 0)),
            _invariant_spec((1, Dv), lambda i: (0, 0)),
            _invariant_spec((Dv, Dop), lambda i: (0, 0)),
            _invariant_spec((1, Dop), lambda i: (0, 0)),
        ],
        out_specs=pl.BlockSpec((tm, Dop), lambda i: (i, 0)),
        compiler_params=pltpu.CompilerParams(
            dimension_semantics=("parallel",),
            vmem_limit_bytes=vmem_limit),
    )(x, w_vis, b_vis.reshape(1, Dv), w_proj_pad, b_proj_pad.reshape(1, Dop))


# --------------------------------------------------------------------------
# Fused LM-head kernel: per-token  nll = logsumexp(hidden @ w_head) - logit[label]
# Online (running max / sum-exp) reduction over vocab tiles; the target logit
# is accumulated from the same logits tile (same operands, same precision).
# The per-token result is written ONCE at the last vocab step.
# --------------------------------------------------------------------------
def lm_nll_pallas(hidden, w_head, labels, *, tm_max, tv_max, vmem_limit):
    M, D = hidden.shape
    D2, V = w_head.shape
    assert D == D2
    itemsize = jnp.dtype(hidden.dtype).itemsize

    # Vocab tile: lane-aligned multiple of 128; no HBM padding of w_head —
    # the ragged last tile is masked in-kernel.
    tv = min(tv_max, _round_up(V, 128))

    # VMEM budget (review formula): 2*D*tv (w stream) + 2*tm*D (hidden) +
    # ~2*tm*tv (f32 logits working set). Shrink tv first (arithmetic intensity
    # is ~ tm), then tm.
    def _need(tm_, tv_):
        return (2 * D * tv_ * itemsize + 2 * tm_ * D * itemsize
                + 2 * tm_ * tv_ * 4 + 16 * tm_ * 4)
    budget = (vmem_limit * 3) // 5
    while _need(tm_max, tv) > budget and tv > 128:
        tv = max(128, (tv // 2) // 128 * 128)
    while _need(tm_max, tv) > budget and tm_max > 128:
        tm_max = max(128, (tm_max // 2) // 8 * 8)

    tm, num_mt = _row_tiling(M, tm_max)     # >= 2 row tiles when M allows (v7x)
    num_vt = _cdiv(V, tv)
    ragged_v = (V % tv) != 0

    def kernel(x_ref, w_ref, lab_ref, nll_ref, m_scr, l_scr, t_scr):
        vi = pl.program_id(1)

        @pl.when(vi == 0)
        def _():
            m_scr[...] = jnp.full_like(m_scr, -jnp.inf)
            l_scr[...] = jnp.zeros_like(l_scr)
            t_scr[...] = jnp.zeros_like(t_scr)

        logits = jnp.dot(x_ref[...], w_ref[...],
                         preferred_element_type=jnp.float32)          # (tm, tv) f32
        cols = vi * tv + jax.lax.broadcasted_iota(jnp.int32, logits.shape, 1)
        if ragged_v:
            logits = jnp.where(cols < V, logits, -jnp.inf)            # garbage cols masked

        # Fused target-logit: at most one column per row matches its label
        # (label == -100 never matches -> contributes 0, masked by `valid`).
        t_scr[...] += jnp.sum(jnp.where(cols == lab_ref[...], logits, 0.0),
                              axis=1, keepdims=True)

        m_prev = m_scr[...]
        m_new = jnp.maximum(m_prev, jnp.max(logits, axis=1, keepdims=True))
        alpha = jnp.exp(m_prev - m_new)
        l_scr[...] = alpha * l_scr[...] + jnp.sum(jnp.exp(logits - m_new),
                                                  axis=1, keepdims=True)
        m_scr[...] = m_new

        @pl.when(vi == num_vt - 1)
        def _():
            nll_ref[...] = m_scr[...] + jnp.log(l_scr[...]) - t_scr[...]

    nll = pl.pallas_call(
        kernel,
        out_shape=jax.ShapeDtypeStruct((M, 1), jnp.float32),
        grid=(num_mt, num_vt),                       # vocab reduction axis last
        in_specs=[
            pl.BlockSpec((tm, D), lambda mi, vi: (mi, 0)),
            pl.BlockSpec((D, tv), lambda mi, vi: (0, vi)),
            pl.BlockSpec((tm, 1), lambda mi, vi: (mi, 0)),
        ],
        out_specs=pl.BlockSpec((tm, 1), lambda mi, vi: (mi, 0)),
        scratch_shapes=[pltpu.VMEM((tm, 1), jnp.float32)] * 3,   # running max / sumexp / tgt
        compiler_params=pltpu.CompilerParams(
            # M tiles parallel (megacore-shardable on v7x), vocab sweep arbitrary.
            dimension_semantics=("parallel", "arbitrary"),
            vmem_limit_bytes=vmem_limit),
    )(hidden, w_head, labels.reshape(M, 1))
    return nll[:, 0]


# --------------------------------------------------------------------------
# Synthetic multimodal model mirroring GeneraliazedMultimodalModels.forward
# --------------------------------------------------------------------------
class GeneraliazedMultimodalModelsJAX:
    def __init__(self, key, vocab=256, dim=32, vision_dim=64, patch=4,
                 img_ch=3, img_hw=16, lm_loss_scale=1.0,
                 freeze_vision_encoder=True, add_patch_pos=False,
                 compute_dtype=jnp.bfloat16):
        self.vocab, self.dim, self.vision_dim = vocab, dim, vision_dim
        self.patch, self.img_ch = patch, img_ch
        self.num_queries = (img_hw // patch) ** 2       # projector.num_queries
        self.embed_dim = dim                            # projector.embed_dim
        self.lm_loss_scale = lm_loss_scale
        self.freeze_vision_encoder = freeze_vision_encoder
        self.add_patch_pos = add_patch_pos
        # bf16 operands halve the dominant HBM streams and hit the native bf16
        # MXU path on v5e/v6e/v7x; accumulation stays f32 in-kernel.
        # Pass jnp.float32 to reproduce reference numerics exactly.
        self.compute_dtype = compute_dtype
        self.hw = _HW

        ks = jax.random.split(key, 6)
        patch_dim = img_ch * patch * patch
        self.embed_table = jax.random.normal(ks[0], (vocab, dim), jnp.float32) * 0.02
        w_vis = jax.random.normal(ks[1], (patch_dim, vision_dim), jnp.float32) * (patch_dim ** -0.5)
        self.b_vis = jnp.zeros((vision_dim,), jnp.float32)
        w_proj = jax.random.normal(ks[2], (vision_dim, dim), jnp.float32) * (vision_dim ** -0.5)
        b_proj = jnp.zeros((dim,), jnp.float32)
        w_head = jax.random.normal(ks[3], (dim, vocab), jnp.float32) * (dim ** -0.5)
        if add_patch_pos:
            self.patch_pos_embed = (dim ** -0.5) * jax.random.normal(ks[4], (4, dim), jnp.float32)

        # One-off (init-time) layout prep: lane-dense projector output (pad dim
        # to a multiple of 128) and compute-dtype weight copies — nothing is
        # padded or cast per forward call.
        self.dim_pad = _round_up(dim, 128)
        self.w_vis_c = w_vis.astype(compute_dtype)
        self.w_proj_c = jnp.pad(w_proj, ((0, 0), (0, self.dim_pad - dim))).astype(compute_dtype)
        self.b_proj_pad = jnp.pad(b_proj, ((0, self.dim_pad - dim),))
        self.w_head_c = w_head.astype(compute_dtype)
        # TODO(synk): on v7x, the head-weight stream could additionally be stored fp8.

    # ---- NCHW patchify (layout glue, plain JAX) ----
    def _patchify(self, images):
        N, C, H, W = images.shape
        p = self.patch
        x = images.reshape(N, C, H // p, p, W // p, p)
        x = x.transpose(0, 2, 4, 1, 3, 5).reshape(N * (H // p) * (W // p), C * p * p)
        return x

    # ---- fused vision encoder + projector (single Pallas launch) ----
    # Projector is per-token linear, so projecting all images and selecting the
    # cmp subset afterwards is numerically identical to
    # projector(vision_encoder(images)[embeds_cmp_mask]).
    # freeze_vision_encoder => eval/no-grad in torch; functional no-op here.
    def vision_and_project(self, images):
        N = images.shape[0]
        x = self._patchify(images).astype(self.compute_dtype)
        proj = vis_proj_pallas(x, self.w_vis_c, self.b_vis,
                               self.w_proj_c, self.b_proj_pad,
                               tm_max=self.hw["tm_vp"],
                               vmem_limit=self.hw["vmem_limit"])
        proj = proj[:, :self.dim]                         # drop lane-padding columns
        return proj.reshape(N, self.num_queries, self.dim)

    # ---- forward, mirroring the PyTorch control flow (fully jittable) ----
    def forward(self, input_ids, images, attention_mask, labels,
                embeds_gen_mask, embeds_cmp_mask, ids_gen_mask, ids_cmp_mask,
                patch_positions=None):
        del embeds_gen_mask, ids_gen_mask, attention_mask   # unused by the loss
        input_embeds = jnp.take(self.embed_table, input_ids, axis=0)   # (bz, sq, dim)
        bz, sq, dim = input_embeds.shape

        if images is not None:
            N = images.shape[0]
            Q = self.num_queries
            proj = self.vision_and_project(images)                     # (N, Q, dim)

            if self.add_patch_pos and patch_positions is not None:
                pp = patch_positions.astype(proj.dtype)
                pp = jnp.concatenate([pp, 1.0 - pp], axis=-1) / 2.0
                rel_pos = pp @ self.patch_pos_embed                    # (N, dim)
                proj = proj + rel_pos[:, None, :]

            # Device-side equivalent of:
            #   image_embeds_lm = projector(image_embeds[embeds_cmp_mask])
            #   input_embeds[ids_cmp_mask] = image_embeds_lm.reshape(-1, dim)
            # Tokens of cmp images first (stable order), consumed in row-major
            # True order of ids_cmp_mask.  NOTE: assumes
            # count(ids_cmp_mask) == num_queries * count(embeds_cmp_mask); on a
            # mismatch the clip reads a wrong token instead of raising
            # (well-formed inputs are identical to the torch boolean indexing).
            cmp_mask = embeds_cmp_mask.astype(bool)
            order = jnp.argsort(jnp.logical_not(cmp_mask), stable=True)
            tokens = proj[order].reshape(N * Q, dim)
            flat_mask = ids_cmp_mask.reshape(-1).astype(bool)
            tok_idx = jnp.clip(jnp.cumsum(flat_mask.astype(jnp.int32)) - 1, 0, N * Q - 1)
            has_image = jnp.sum(cmp_mask) > 0
            write_mask = flat_mask & has_image
            flat_embeds = input_embeds.reshape(-1, dim)
            flat_embeds = jnp.where(write_mask[:, None], tokens[tok_idx], flat_embeds)
            input_embeds = flat_embeds.reshape(bz, sq, dim)
        # else / no-cmp case: the torch fake-image branch only adds
        # 0.0 * projector(noise) (a grad-flow trick) -> forward-value no-op.
        # TODO(synk): replicate the fake-image projector call only if
        # autograd-graph parity with torch is ever required.

        # ---- causal-LM loss: shifted cross-entropy, ignore_index = -100
        # (HF convention: the loss mask is labels-only).
        # TODO(synk): the language_model transformer decoder stack is not
        # modeled; hidden states are taken directly from the fused embeddings.
        hidden = input_embeds[:, :-1, :].reshape(-1, dim)               # (M, dim)
        lab = labels[:, 1:].reshape(-1).astype(jnp.int32)               # (M,)
        valid = (lab != -100).astype(jnp.float32)

        # Fused LM-head kernel: per-token nll = logsumexp(logits) - logit[label],
        # both sides from the same bf16 operands / f32 accumulation.
        nll = lm_nll_pallas(hidden.astype(self.compute_dtype), self.w_head_c, lab,
                            tm_max=self.hw["tm_lse"], tv_max=self.hw["tv"],
                            vmem_limit=self.hw["vmem_limit"])           # (M,) f32

        lm_loss = jnp.sum(nll * valid) / jnp.maximum(jnp.sum(valid), 1.0)
        total_loss = self.lm_loss_scale * lm_loss
        return {'total_loss': total_loss, 'lm_loss': lm_loss}

    # TODO(synk): generate() (autoregressive decoding) not implemented in Pallas.


# --------------------------------------------------------------------------
if __name__ == "__main__":
    key = jax.random.PRNGKey(0)
    k_model, k_ids, k_img, k_lab = jax.random.split(key, 4)

    bz, sq, vocab = 2, 32, 256
    model = GeneraliazedMultimodalModelsJAX(k_model, vocab=vocab, dim=32,
                                            vision_dim=64, patch=4,
                                            img_ch=3, img_hw=16,
                                            lm_loss_scale=1.0)

    input_ids = jax.random.randint(k_ids, (bz, sq), 0, vocab, dtype=jnp.int32)
    images = jax.random.normal(k_img, (2, 3, 16, 16), jnp.float32)      # NCHW
    attention_mask = jnp.ones((bz, sq), jnp.int32)
    labels = jax.random.randint(k_lab, (bz, sq), 0, vocab, dtype=jnp.int32)
    labels = labels.at[:, :4].set(-100)                                 # ignored tokens

    # One of the two images is "comprehension" input; its 16 projected tokens
    # are scattered into batch row 0, positions 5..20.
    embeds_cmp_mask = jnp.array([True, False])
    embeds_gen_mask = jnp.array([False, False])
    ids_cmp_mask = jnp.zeros((bz, sq), dtype=bool).at[0, 5:5 + model.num_queries].set(True)
    ids_gen_mask = jnp.zeros((bz, sq), dtype=bool)

    fwd = jax.jit(model.forward)        # end-to-end jit: no host syncs between kernels
    out = fwd(input_ids, images, attention_mask, labels,
              embeds_gen_mask, embeds_cmp_mask, ids_gen_mask, ids_cmp_mask)

    jax.block_until_ready(out['total_loss'])
    assert bool(jnp.isfinite(out['total_loss']))
    print("KERNEL_OK")
</pallas_src>

<mosaic_0001>
module attributes {stable_mosaic.version = 11 : i64} {
  func.func @_vis_proj_kernel(%arg0: i32, %arg1: memref<16x48xbf16, #tpu.memory_space<vmem>>, %arg2: memref<48x64xbf16, #tpu.memory_space<vmem>>, %arg3: memref<1x64xf32, #tpu.memory_space<vmem>>, %arg4: memref<64x128xbf16, #tpu.memory_space<vmem>>, %arg5: memref<1x128xf32, #tpu.memory_space<vmem>>, %arg6: memref<16x128xf32, #tpu.memory_space<vmem>>) attributes {dimension_semantics = [#tpu.dimension_semantics<parallel>], iteration_bounds = array<i64: 2>, scalar_prefetch = 0 : i64, scratch_operands = 0 : i64, tpu.core_type = #tpu.core_type<tc>, window_params = [{transform_indices = @transform_0, window_bounds = array<i64: 16, 48>}, {pipeline_mode = #tpu.pipeline_mode<synchronous>, transform_indices = @transform_1, window_bounds = array<i64: 48, 64>}, {pipeline_mode = #tpu.pipeline_mode<synchronous>, transform_indices = @transform_2, window_bounds = array<i64: 1, 64>}, {pipeline_mode = #tpu.pipeline_mode<synchronous>, transform_indices = @transform_3, window_bounds = array<i64: 64, 128>}, {pipeline_mode = #tpu.pipeline_mode<synchronous>, transform_indices = @transform_4, window_bounds = array<i64: 1, 128>}, {transform_indices = @transform_5, window_bounds = array<i64: 16, 128>}]} {
    %c0 = arith.constant 0 : index
    %c0_0 = arith.constant 0 : index
    %0 = vector.load %arg1[%c0, %c0_0] : memref<16x48xbf16, #tpu.memory_space<vmem>>, vector<16x48xbf16>
    %c0_1 = arith.constant 0 : index
    %c0_2 = arith.constant 0 : index
    %1 = vector.load %arg2[%c0_1, %c0_2] : memref<48x64xbf16, #tpu.memory_space<vmem>>, vector<48x64xbf16>
    %cst = arith.constant dense<0.000000e+00> : vector<16x64xf32>
    %2 = tpu.matmul %0, %1, %cst {dimension_numbers = #tpu.dot_dimension_numbers<[1], [0], [0], [1], [0, 0, 1, 1], [], []>} : vector<16x48xbf16>, vector<48x64xbf16>, vector<16x64xf32> -> vector<16x64xf32>
    %c0_3 = arith.constant 0 : index
    %c0_4 = arith.constant 0 : index
    %3 = vector.load %arg3[%c0_3, %c0_4] : memref<1x64xf32, #tpu.memory_space<vmem>>, vector<1x64xf32>
    %4 = vector.broadcast %3 : vector<1x64xf32> to vector<16x64xf32>
    %5 = arith.addf %2, %4 : vector<16x64xf32>
    %6 = arith.truncf %5 : vector<16x64xf32> to vector<16x64xbf16>
    %c0_5 = arith.constant 0 : index
    %c0_6 = arith.constant 0 : index
    %7 = vector.load %arg4[%c0_5, %c0_6] : memref<64x128xbf16, #tpu.memory_space<vmem>>, vector<64x128xbf16>
    %cst_7 = arith.constant dense<0.000000e+00> : vector<16x128xf32>
    %8 = tpu.matmul %6, %7, %cst_7 {dimension_numbers = #tpu.dot_dimension_numbers<[1], [0], [0], [1], [0, 0, 1, 1], [], []>} : vector<16x64xbf16>, vector<64x128xbf16>, vector<16x128xf32> -> vector<16x128xf32>
    %c0_8 = arith.constant 0 : index
    %c0_9 = arith.constant 0 : index
    %9 = vector.load %arg5[%c0_8, %c0_9] : memref<1x128xf32, #tpu.memory_space<vmem>>, vector<1x128xf32>
    %10 = vector.broadcast %9 : vector<1x128xf32> to vector<16x128xf32>
    %11 = arith.addf %8, %10 : vector<16x128xf32>
    %c0_10 = arith.constant 0 : index
    %c0_11 = arith.constant 0 : index
    %12 = vector.load %arg6[%c0_10, %c0_11] : memref<16x128xf32, #tpu.memory_space<vmem>>, vector<16x128xf32>
    tpu.vector_store %arg6[%c0_10, %c0_11], %11 {strides = array<i32>} : memref<16x128xf32, #tpu.memory_space<vmem>>, vector<16x128xf32>,
    return
  }
  func.func @transform_0(%arg0: i32) -> (i32, i32) {
    %c0_i32 = arith.constant 0 : i32
    %c0_i32_0 = arith.constant 0 : i32
    return %arg0, %c0_i32 : i32, i32
  }
  func.func @transform_1(%arg0: i32) -> (i32, i32) {
    %c0_i32 = arith.constant 0 : i32
    %c0_i32_0 = arith.constant 0 : i32
    %c0_i32_1 = arith.constant 0 : i32
    return %c0_i32, %c0_i32_0 : i32, i32
  }
  func.func @transform_2(%arg0: i32) -> (i32, i32) {
    %c0_i32 = arith.constant 0 : i32
    %c0_i32_0 = arith.constant 0 : i32
    %c0_i32_1 = arith.constant 0 : i32
    return %c0_i32, %c0_i32_0 : i32, i32
  }
  func.func @transform_3(%arg0: i32) -> (i32, i32) {
    %c0_i32 = arith.constant 0 : i32
    %c0_i32_0 = arith.constant 0 : i32
    %c0_i32_1 = arith.constant 0 : i32
    return %c0_i32, %c0_i32_0 : i32, i32
  }
  func.func @transform_4(%arg0: i32) -> (i32, i32) {
    %c0_i32 = arith.constant 0 : i32
    %c0_i32_0 = arith.constant 0 : i32
    %c0_i32_1 = arith.constant 0 : i32
    return %c0_i32, %c0_i32_0 : i32, i32
  }
  func.func @transform_5(%arg0: i32) -> (i32, i32) {
    %c0_i32 = arith.constant 0 : i32
    %c0_i32_0 = arith.constant 0 : i32
    return %arg0, %c0_i32 : i32, i32
  }
}

module attributes {stable_mosaic.version = 11 : i64} {
  func.func @kernel(%arg0: i32, %arg1: i32, %arg2: memref<32x32xbf16, #tpu.memory_space<vmem>>, %arg3: memref<32x256xbf16, #tpu.memory_space<vmem>>, %arg4: memref<32x1xi32, #tpu.memory_space<vmem>>, %arg5: memref<32x1xf32, #tpu.memory_space<vmem>>, %arg6: memref<32x1xf32, #tpu.memory_space<vmem>>, %arg7: memref<32x1xf32, #tpu.memory_space<vmem>>, %arg8: memref<32x1xf32, #tpu.memory_space<vmem>>) attributes {dimension_semantics = [#tpu.dimension_semantics<parallel>, #tpu.dimension_semantics<arbitrary>], iteration_bounds = array<i64: 2, 1>, scalar_prefetch = 0 : i64, scratch_operands = 3 : i64, tpu.core_type = #tpu.core_type<tc>, window_params = [{transform_indices = @transform_0, window_bounds = array<i64: 32, 32>}, {transform_indices = @transform_1, window_bounds = array<i64: 32, 256>}, {transform_indices = @transform_2, window_bounds = array<i64: 32, 1>}, {transform_indices = @transform_3, window_bounds = array<i64: 32, 1>}]} {
    %c0_i32 = arith.constant 0 : i32
    %0 = arith.cmpi eq, %arg1, %c0_i32 : i32
    %1 = arith.extui %0 : i1 to i32
    %c0_i32_0 = arith.constant 0 : i32
    %2 = arith.cmpi ne, %1, %c0_i32_0 : i32
    scf.if %2 {
      %cst_24 = arith.constant 0xFF800000 : f32
      %39 = vector.broadcast %cst_24 : f32 to vector<32x1xf32>
      %c0_25 = arith.constant 0 : index
      %c0_26 = arith.constant 0 : index
      %40 = vector.load %arg6[%c0_25, %c0_26] : memref<32x1xf32, #tpu.memory_space<vmem>>, vector<32x1xf32>
      tpu.vector_store %arg6[%c0_25, %c0_26], %39 {strides = array<i32>} : memref<32x1xf32, #tpu.memory_space<vmem>>, vector<32x1xf32>,
      %cst_27 = arith.constant 0.000000e+00 : f32
      %41 = vector.broadcast %cst_27 : f32 to vector<32x1xf32>
      %c0_28 = arith.constant 0 : index
      %c0_29 = arith.constant 0 : index
      %42 = vector.load %arg7[%c0_28, %c0_29] : memref<32x1xf32, #tpu.memory_space<vmem>>, vector<32x1xf32>
      tpu.vector_store %arg7[%c0_28, %c0_29], %41 {strides = array<i32>} : memref<32x1xf32, #tpu.memory_space<vmem>>, vector<32x1xf32>,
      %cst_30 = arith.constant 0.000000e+00 : f32
      %43 = vector.broadcast %cst_30 : f32 to vector<32x1xf32>
      %c0_31 = arith.constant 0 : index
      %c0_32 = arith.constant 0 : index
      %44 = vector.load %arg8[%c0_31, %c0_32] : memref<32x1xf32, #tpu.memory_space<vmem>>, vector<32x1xf32>
      tpu.vector_store %arg8[%c0_31, %c0_32], %43 {strides = array<i32>} : memref<32x1xf32, #tpu.memory_space<vmem>>, vector<32x1xf32>,
    } else {
    }
    %c0 = arith.constant 0 : index
    %c0_1 = arith.constant 0 : index
    %3 = vector.load %arg2[%c0, %c0_1] : memref<32x32xbf16, #tpu.memory_space<vmem>>, vector<32x32xbf16>
    %c0_2 = arith.constant 0 : index
    %c0_3 = arith.constant 0 : index
    %4 = vector.load %arg3[%c0_2, %c0_3] : memref<32x256xbf16, #tpu.memory_space<vmem>>, vector<32x256xbf16>
    %cst = arith.constant dense<0.000000e+00> : vector<32x256xf32>
    %5 = tpu.matmul %3, %4, %cst {dimension_numbers = #tpu.dot_dimension_numbers<[1], [0], [0], [1], [0, 0, 1, 1], [], []>} : vector<32x32xbf16>, vector<32x256xbf16>, vector<32x256xf32> -> vector<32x256xf32>
    %c256_i32 = arith.constant 256 : i32
    %6 = arith.muli %arg1, %c256_i32 : i32
    %7 = tpu.iota {dimensions = array<i32: 1>} : vector<32x256xi32>
    %8 = vector.broadcast %6 : i32 to vector<32x256xi32>
    %9 = arith.addi %8, %7 : vector<32x256xi32>
    %c0_4 = arith.constant 0 : index
    %c0_5 = arith.constant 0 : index
    %10 = vector.load %arg8[%c0_4, %c0_5] : memref<32x1xf32, #tpu.memory_space<vmem>>, vector<32x1xf32>
    %c0_6 = arith.constant 0 : index
    %c0_7 = arith.constant 0 : index
    %11 = vector.load %arg4[%c0_6, %c0_7] : memref<32x1xi32, #tpu.memory_space<vmem>>, vector<32x1xi32>
    %12 = vector.broadcast %11 : vector<32x1xi32> to vector<32x256xi32>
    %13 = arith.cmpi eq, %9, %12 : vector<32x256xi32>
    %cst_8 = arith.constant 0.000000e+00 : f32
    %14 = vector.broadcast %cst_8 : f32 to vector<32x256xf32>
    %15 = arith.select %13, %5, %14 : vector<32x256xi1>, vector<32x256xf32>
    %cst_9 = arith.constant dense<0.000000e+00> : vector<32xf32>
    %16 = vector.multi_reduction <add>, %15, %cst_9 [1] : vector<32x256xf32> to vector<32xf32>
    %17 = vector.shape_cast %16 : vector<32xf32> to vector<32x1xf32>
    %18 = arith.addf %10, %17 : vector<32x1xf32>
    %c0_10 = arith.constant 0 : index
    %c0_11 = arith.constant 0 : index
    %19 = vector.load %arg8[%c0_10, %c0_11] : memref<32x1xf32, #tpu.memory_space<vmem>>, vector<32x1xf32>
    tpu.vector_store %arg8[%c0_10, %c0_11], %18 {strides = array<i32>} : memref<32x1xf32, #tpu.memory_space<vmem>>, vector<32x1xf32>,
    %c0_12 = arith.constant 0 : index
    %c0_13 = arith.constant 0 : index
    %20 = vector.load %arg6[%c0_12, %c0_13] : memref<32x1xf32, #tpu.memory_space<vmem>>, vector<32x1xf32>
    %cst_14 = arith.constant dense<0xFF800000> : vector<32xf32>
    %21 = vector.multi_reduction <maximumf>, %5, %cst_14 [1] : vector<32x256xf32> to vector<32xf32>
    %22 = vector.shape_cast %21 : vector<32xf32> to vector<32x1xf32>
    %23 = arith.maximumf %20, %22 : vector<32x1xf32>
    %24 = arith.subf %20, %23 : vector<32x1xf32>
    %25 = math.exp %24 : vector<32x1xf32>
    %c0_15 = arith.constant 0 : index
    %c0_16 = arith.constant 0 : index
    %26 = vector.load %arg7[%c0_15, %c0_16] : memref<32x1xf32, #tpu.memory_space<vmem>>, vector<32x1xf32>
    %27 = arith.mulf %25, %26 : vector<32x1xf32>
    %28 = vector.broadcast %23 : vector<32x1xf32> to vector<32x256xf32>
    %29 = arith.subf %5, %28 : vector<32x256xf32>
    %30 = math.exp %29 : vector<32x256xf32>
    %cst_17 = arith.constant dense<0.000000e+00> : vector<32xf32>
    %31 = vector.multi_reduction <add>, %30, %cst_17 [1] : vector<32x256xf32> to vector<32xf32>
    %32 = vector.shape_cast %31 : vector<32xf32> to vector<32x1xf32>
    %33 = arith.addf %27, %32 : vector<32x1xf32>
    %c0_18 = arith.constant 0 : index
    %c0_19 = arith.constant 0 : index
    %34 = vector.load %arg7[%c0_18, %c0_19] : memref<32x1xf32, #tpu.memory_space<vmem>>, vector<32x1xf32>
    tpu.vector_store %arg7[%c0_18, %c0_19], %33 {strides = array<i32>} : memref<32x1xf32, #tpu.memory_space<vmem>>, vector<32x1xf32>,
    %c0_20 = arith.constant 0 : index
    %c0_21 = arith.constant 0 : index
    %35 = vector.load %arg6[%c0_20, %c0_21] : memref<32x1xf32, #tpu.memory_space<vmem>>, vector<32x1xf32>
    tpu.vector_store %arg6[%c0_20, %c0_21], %23 {strides = array<i32>} : memref<32x1xf32, #tpu.memory_space<vmem>>, vector<32x1xf32>,
    %c0_i32_22 = arith.constant 0 : i32
    %36 = arith.cmpi eq, %arg1, %c0_i32_22 : i32
    %37 = arith.extui %36 : i1 to i32
    %c0_i32_23 = arith.constant 0 : i32
    %38 = arith.cmpi ne, %37, %c0_i32_23 : i32
    scf.if %38 {
      %c0_24 = arith.constant 0 : index
      %c0_25 = arith.constant 0 : index
      %39 = vector.load %arg6[%c0_24, %c0_25] : memref<32x1xf32, #tpu.memory_space<vmem>>, vector<32x1xf32>
      %c0_26 = arith.constant 0 : index
      %c0_27 = arith.constant 0 : index
      %40 = vector.load %arg7[%c0_26, %c0_27] : memref<32x1xf32, #tpu.memory_space<vmem>>, vector<32x1xf32>
      %41 = math.log %40 : vector<32x1xf32>
      %42 = arith.addf %39, %41 : vector<32x1xf32>
      %c0_28 = arith.constant 0 : index
      %c0_29 = arith.constant 0 : index
      %43 = vector.load %arg8[%c0_28, %c0_29] : memref<32x1xf32, #tpu.memory_space<vmem>>, vector<32x1xf32>
      %44 = arith.subf %42, %43 : vector<32x1xf32>
      %c0_30 = arith.constant 0 : index
      %c0_31 = arith.constant 0 : index
      %45 = vector.load %arg5[%c0_30, %c0_31] : memref<32x1xf32, #tpu.memory_space<vmem>>, vector<32x1xf32>
      tpu.vector_store %arg5[%c0_30, %c0_31], %44 {strides = array<i32>} : memref<32x1xf32, #tpu.memory_space<vmem>>, vector<32x1xf32>,
    } else {
    }
    return
  }
  func.func @transform_0(%arg0: i32, %arg1: i32) -> (i32, i32) {
    %c0_i32 = arith.constant 0 : i32
    %c0_i32_0 = arith.constant 0 : i32
    return %arg0, %c0_i32 : i32, i32
  }
  func.func @transform_1(%arg0: i32, %arg1: i32) -> (i32, i32) {
    %c0_i32 = arith.constant 0 : i32
    %c0_i32_0 = arith.constant 0 : i32
    return %c0_i32, %arg1 : i32, i32
  }
  func.func @transform_2(%arg0: i32, %arg1: i32) -> (i32, i32) {
    %c0_i32 = arith.constant 0 : i32
    %c0_i32_0 = arith.constant 0 : i32
    return %arg0, %c0_i32 : i32, i32
  }
  func.func @transform_3(%arg0: i32, %arg1: i32) -> (i32, i32) {
    %c0_i32 = arith.constant 0 : i32
    %c0_i32_0 = arith.constant 0 : i32
    return %arg0, %c0_i32 : i32, i32
  }
}

</mosaic_0001>

<llo_original>
// kernel: forward.2
$region0: #{forward.2}
  #allocation0 [shape = 'u32[]', space=smem, size = 0x4, offset = 0x4, fixed_abs, tag = 'smem constant byte address 0x4 - core index']
  #allocation1 [shape = 'u32[144,128]{1,0:T(1,128)}', space=vmem, size = 0x12000, scoped, tag = 'internal scratch']
  %s0 = inlined_call_operand.hbm [shape: bf16[32,48], index: 0, kind: input, shape index: {}]
  %s1 = inlined_call_operand.hbm [shape: bf16[48,64], index: 1, kind: input, shape index: {}]
  %s2 = inlined_call_operand.hbm [shape: f32[1,64], index: 2, kind: input, shape index: {}]
  %s3 = inlined_call_operand.hbm [shape: bf16[64,128], index: 3, kind: input, shape index: {}]
  %s4 = inlined_call_operand.hbm [shape: f32[1,128], index: 4, kind: input, shape index: {}]
  %s5 = inlined_call_operand.hbm [shape: f32[32,128], index: 5, kind: output, shape index: {}]
  %s6 = sld [smem:[#allocation0]]
  $region73: #{forward.2} parent=0
    _
  %s8 = ssub.s32 1, %s6
  %s9 = scalar_select 0, %s8, %s6
  $region1: #{forward.2} parent=0
    #allocation2 [shape = 'u8[8192]{0}', space=vmem, size = 0x2000, scoped, tag = 'input window, operand 0']
    #allocation3 [shape = 's32[2]{0}', space=sflag, size = 0x8, scoped, tag = 'scoped memory for forward.2']
    #allocation4 [shape = 's32[2]{0}', space=sflag, size = 0x8, scoped, tag = 'scoped memory for forward.2']
    #allocation5 [shape = 'u8[12288]{0}', space=vmem, size = 0x3000, scoped, tag = 'input window, operand 1, single buffered']
    #allocation6 [shape = 's32[1]{0}', space=sflag, size = 0x4, scoped, tag = 'scoped memory for forward.2']
    #allocation7 [shape = 'u8[512]{0}', space=vmem, size = 0x400, scoped, tag = 'input window, operand 2, single buffered']
    #allocation8 [shape = 'u8[16384]{0}', space=vmem, size = 0x4000, scoped, tag = 'input window, operand 3, single buffered']
    #allocation9 [shape = 's32[1]{0}', space=sflag, size = 0x4, scoped, tag = 'scoped memory for forward.2']
    #allocation10 [shape = 'u8[512]{0}', space=vmem, size = 0x400, scoped, tag = 'input window, operand 4, single buffered']
    #allocation11 [shape = 'u8[16384]{0}', space=vmem, size = 0x4000, scoped, tag = 'output window, operand 0']
    %10 = vsyncpa [#allocation3], 0
    %s11 = scalar_lea.sflag [#allocation3], 1
    %12 = vsyncpa %s11, 0
    %13 = vsyncpa [#allocation6], 0
    %14 = vsyncpa [#allocation9], 0
    %15 = vsyncpa [#allocation4], 0
    %s16 = scalar_lea.sflag [#allocation4], 1
    %17 = vsyncpa %s16, 0
    loop: start=0, step=1, limit=4
    $region2: #{forward.2} parent=1 // loop_pre_header
      _
    $region3: #{forward.2} parent=1 // loop_header
      %s19 = sphi 0, %s23
      %p20 = scmp.ge.s32.totalorder %s19, 4
      %s29 = sphi 0, %s31
      %s32 = sphi 0, %s29
      %s33 = sphi 0, %s32
      %s49 = sphi 0, %s33
      %s53 = sphi 0, %s53
      %s55 = sphi 0, %s53
      %s56 = sphi 0, %s55
      %s70 = sphi 0, %s56
      %s74 = sphi 0, %s74
      %s76 = sphi 0, %s74
      %s77 = sphi 0, %s76
      %s91 = sphi 0, %s77
      %s95 = sphi 0, %s95
      %s97 = sphi 0, %s95
      %s98 = sphi 0, %s97
      %s112 = sphi 0, %s98
      %s116 = sphi 0, %s116
      %s118 = sphi 0, %s116
      %s119 = sphi 0, %s118
      %s133 = sphi 0, %s119
      %s139 = sphi 0, %s141
      %s142 = sphi 0, %s139
      %s143 = sphi 0, %s142
      %s159 = sphi 0, %s143
    $region4: #{forward.2} parent=1 // loop_header_branch
      %22 = sbr.rel (%p20) target = $region8
    $region5: #{forward.2} parent=1 // loop_body
      %s24 = ssub.s32 %s19, 1
      %s25 = ssub.s32 %s19, 2
      %s26 = sadd.s32 %s19, 1
      %s27 = ssub.s32 %s19, %s26
      %p28 = scmp.eq.s32.totalorder %s27, 0
      %s30 = sadd.s32 %s29, 1
      %s31 = scalar_select %p28, %s29, %s30
      %p34 = pneg %p28
      %p35 = scmp.eq.s32.totalorder %s19, 1
      %p36 = por %p34, %p35
      %p37 = scmp.ne.s32.totalorder %s29, %s32
      %p38 = scmp.eq.s32.totalorder %s19, 0
      %p39 = por %p37, %p38
      %p40 = scmp.ne.s32.totalorder %s29, %s32
      %p41 = scmp.eq.s32.totalorder %s24, 1
      %p42 = por %p40, %p41
      %p43 = scmp.ne.s32.totalorder %s32, %s33
      %p44 = scmp.eq.s32.totalorder %s24, 0
      %p45 = por %p43, %p44
      %p46 = scmp.ne.s32.totalorder %s32, %s33
      %p47 = scmp.eq.s32.totalorder %s25, 1
      %p48 = por %p46, %p47
      %p50 = scmp.ne.s32.totalorder %s33, %s49
      %p51 = scmp.eq.s32.totalorder %s25, 0
      %p52 = por %p50, %p51
      %s54 = sadd.s32 %s53, 1
      %p57 = scmp.eq.s32.totalorder %s19, 1
      %p58 = scmp.ne.s32.totalorder %s53, %s55
      %p59 = scmp.eq.s32.totalorder %s19, 0
      %p60 = por %p58, %p59
      %p61 = scmp.ne.s32.totalorder %s53, %s55
      %p62 = scmp.eq.s32.totalorder %s24, 1
      %p63 = por %p61, %p62
      %p64 = scmp.ne.s32.totalorder %s55, %s56
      %p65 = scmp.eq.s32.totalorder %s24, 0
      %p66 = por %p64, %p65
      %p67 = scmp.ne.s32.totalorder %s55, %s56
      %p68 = scmp.eq.s32.totalorder %s25, 1
      %p69 = por %p67, %p68
      %p71 = scmp.ne.s32.totalorder %s56, %s70
      %p72 = scmp.eq.s32.totalorder %s25, 0
      %p73 = por %p71, %p72
      %s75 = sadd.s32 %s74, 1
      %p78 = scmp.eq.s32.totalorder %s19, 1
      %p79 = scmp.ne.s32.totalorder %s74, %s76
      %p80 = scmp.eq.s32.totalorder %s19, 0
      %p81 = por %p79, %p80
      %p82 = scmp.ne.s32.totalorder %s74, %s76
      %p83 = scmp.eq.s32.totalorder %s24, 1
      %p84 = por %p82, %p83
      %p85 = scmp.ne.s32.totalorder %s76, %s77
      %p86 = scmp.eq.s32.totalorder %s24, 0
      %p87 = por %p85, %p86
      %p88 = scmp.ne.s32.totalorder %s76, %s77
      %p89 = scmp.eq.s32.totalorder %s25, 1
      %p90 = por %p88, %p89
      %p92 = scmp.ne.s32.totalorder %s77, %s91
      %p93 = scmp.eq.s32.totalorder %s25, 0
      %p94 = por %p92, %p93
      %s96 = sadd.s32 %s95, 1
      %p99 = scmp.eq.s32.totalorder %s19, 1
      %p100 = scmp.ne.s32.totalorder %s95, %s97
      %p101 = scmp.eq.s32.totalorder %s19, 0
      %p102 = por %p100, %p101
      %p103 = scmp.ne.s32.totalorder %s95, %s97
      %p104 = scmp.eq.s32.totalorder %s24, 1
      %p105 = por %p103, %p104
      %p106 = scmp.ne.s32.totalorder %s97, %s98
      %p107 = scmp.eq.s32.totalorder %s24, 0
      %p108 = por %p106, %p107
      %p109 = scmp.ne.s32.totalorder %s97, %s98
      %p110 = scmp.eq.s32.totalorder %s25, 1
      %p111 = por %p109, %p110
      %p113 = scmp.ne.s32.totalorder %s98, %s112
      %p114 = scmp.eq.s32.totalorder %s25, 0
      %p115 = por %p113, %p114
      %s117 = sadd.s32 %s116, 1
      %p120 = scmp.eq.s32.totalorder %s19, 1
      %p121 = scmp.ne.s32.totalorder %s116, %s118
      %p122 = scmp.eq.s32.totalorder %s19, 0
      %p123 = por %p121, %p122
      %p124 = scmp.ne.s32.totalorder %s116, %s118
      %p125 = scmp.eq.s32.totalorder %s24, 1
      %p126 = por %p124, %p125
      %p127 = scmp.ne.s32.totalorder %s118, %s119
      %p128 = scmp.eq.s32.totalorder %s24, 0
      %p129 = por %p127, %p128
      %p130 = scmp.ne.s32.totalorder %s118, %s119
      %p131 = scmp.eq.s32.totalorder %s25, 1
      %p132 = por %p130, %p131
      %p134 = scmp.ne.s32.totalorder %s119, %s133
      %p135 = scmp.eq.s32.totalorder %s25, 0
      %p136 = por %p134, %p135
      %s137 = ssub.s32 %s19, %s26
      %p138 = scmp.eq.s32.totalorder %s137, 0
      %s140 = sadd.s32 %s139, 1
      %s141 = scalar_select %p138, %s139, %s140
      %p144 = pneg %p138
      %p145 = scmp.eq.s32.totalorder %s19, 1
      %p146 = por %p144, %p145
      %p147 = scmp.ne.s32.totalorder %s139, %s142
      %p148 = scmp.eq.s32.totalorder %s19, 0
      %p149 = por %p147, %p148
      %p150 = scmp.ne.s32.totalorder %s139, %s142
      %p151 = scmp.eq.s32.totalorder %s24, 1
      %p152 = por %p150, %p151
      %p153 = scmp.ne.s32.totalorder %s142, %s143
      %p154 = scmp.eq.s32.totalorder %s24, 0
      %p155 = por %p153, %p154
      %p156 = scmp.ne.s32.totalorder %s142, %s143
      %p157 = scmp.eq.s32.totalorder %s25, 1
      %p158 = por %p156, %p157
      %p160 = scmp.ne.s32.totalorder %s143, %s159
      %p161 = scmp.eq.s32.totalorder %s25, 0
      %p162 = por %p160, %p161
      %p163 = scmp.le.s32.totalorder 1, %s19
      %p164 = scmp.lt.s32.totalorder %s19, 3
      %p165 = pnand %p163, %p164
      %p166 = pneg %p165
      // Predicated region
      $region9: #{forward.2} parent=5 // pred_check
        _
      $region10: #{forward.2} parent=5 // pred_check_branch
        %168 = sbr.rel (%p165) target = $region12
      $region11: #{forward.2} parent=5 // pred_region
        %s169 = ssub.s32 %s19, 1
        // Predicated region
        $region13: #{forward.2} parent=11 // pred_check
          %p170 = pneg %p66
        $region14: #{forward.2} parent=11 // pred_check_branch
          %172 = sbr.rel (%p170) target = $region16
        $region15: #{forward.2} parent=11 // pred_region
          %s174 = ssub.s32 384, 384
          %175 = vsyncadd [#allocation6], %s174
          %s176 = sshll.u32 [#allocation5], 4
          %s177 = int_to_ptr.vmem [resolvable:$true] %s176
          %182 = dma.hbm_to_vmem [thread:$0]  %s1, 384, %s177, [#allocation6], 64, 64, 4
        $region16: #{forward.2} parent=11 // pred_fallthru
          _
        // Predicated region
        $region17: #{forward.2} parent=11 // pred_check
          %p183 = pneg %p87
        $region18: #{forward.2} parent=11 // pred_check_branch
          %185 = sbr.rel (%p183) target = $region20
        $region19: #{forward.2} parent=11 // pred_region
          %s187 = ssub.s32 16, 16
          %188 = vsyncadd [#allocation6], %s187
          %s190 = sshll.u32 [#allocation7], 4
          %s191 = int_to_ptr.vmem [resolvable:$true] %s190
          %193 = dma.hbm_to_vmem [thread:$0]  %s2, 16, %s191, [#allocation6]
        $region20: #{forward.2} parent=11 // pred_fallthru
          _
        // Predicated region
        $region21: #{forward.2} parent=11 // pred_check
          %p194 = pneg %p108
        $region22: #{forward.2} parent=11 // pred_check_branch
          %196 = sbr.rel (%p194) target = $region24
        $region23: #{forward.2} parent=11 // pred_region
          %s198 = ssub.s32 512, 512
          %199 = vsyncadd [#allocation9], %s198
          %s200 = sshll.u32 [#allocation8], 4
          %s201 = int_to_ptr.vmem [resolvable:$true] %s200
          %206 = dma.hbm_to_vmem [thread:$0]  %s3, 512, %s201, [#allocation9], 64, 64, 4
        $region24: #{forward.2} parent=11 // pred_fallthru
          _
        // Predicated region
        $region25: #{forward.2} parent=11 // pred_check
          %p207 = pneg %p129
        $region26: #{forward.2} parent=11 // pred_check_branch
          %209 = sbr.rel (%p207) target = $region28
        $region27: #{forward.2} parent=11 // pred_region
          %s211 = ssub.s32 16, 16
          %212 = vsyncadd [#allocation9], %s211
          %s214 = sshll.u32 [#allocation10], 4
          %s215 = int_to_ptr.vmem [resolvable:$true] %s214
          %217 = dma.hbm_to_vmem [thread:$0]  %s4, 16, %s215, [#allocation9]
        $region28: #{forward.2} parent=11 // pred_fallthru
          _
      $region12: #{forward.2} parent=5 // pred_fallthru
        _
      %p218 = scmp.lt.s32.totalorder %s19, 2
      // Predicated region
      $region29: #{forward.2} parent=5 // pred_check
        %p219 = pneg %p218
      $region30: #{forward.2} parent=5 // pred_check_branch
        %221 = sbr.rel (%p219) target = $region32
      $region31: #{forward.2} parent=5 // pred_region
        // Predicated region
        $region33: #{forward.2} parent=31 // pred_check
          %p222 = pneg %p39
        $region34: #{forward.2} parent=31 // pred_check_branch
          %224 = sbr.rel (%p222) target = $region36
        $region35: #{forward.2} parent=31 // pred_region
          %s225 = sand.u32 %s29, 1
          %s226 = scalar_lea.sflag [#allocation3], %s225
          %s227 = sand.u32 %s29, 1
          %s228 = smul.addr %s227, 8
          %s229 = scalar_lea.vmem [#allocation2], %s228
          %s230 = smul.u32 2, %s19
          %s232 = ssub.s32 128, 128
          %233 = vsyncadd %s226, %s232
          %s234 = smul.addr %s230, 64
          %s235 = scalar_lea.hbm %s0, %s234
          %s236 = sshll.u32 %s229, 4
          %s237 = int_to_ptr.vmem [resolvable:$true] %s236
          %242 = dma.hbm_to_vmem [thread:$0]  %s235, 128, %s237, %s226, 64, 64, 4
        $region36: #{forward.2} parent=31 // pred_fallthru
          _
      $region32: #{forward.2} parent=5 // pred_fallthru
        _
      %p243 = scmp.le.s32.totalorder 1, %s19
      %p244 = scmp.lt.s32.totalorder %s19, 3
      %p245 = pnand %p243, %p244
      %p246 = pneg %p245
      // Predicated region
      $region37: #{forward.2} parent=5 // pred_check
        _
      $region38: #{forward.2} parent=5 // pred_check_branch
        %248 = sbr.rel (%p245) target = $region40
      $region39: #{forward.2} parent=5 // pred_region
        %s249 = ssub.s32 %s19, 1
        %s250 = sand.u32 %s32, 1
        %s251 = scalar_lea.sflag [#allocation3], %s250
        %s252 = sand.u32 %s32, 1
        %s253 = smul.addr %s252, 8
        %s254 = scalar_lea.vmem [#allocation2], %s253
        // Predicated region
        $region41: #{forward.2} parent=39 // pred_check
          %p255 = pneg %p45
        $region42: #{forward.2} parent=39 // pred_check_branch
          %257 = sbr.rel (%p255) target = $region44
        $region43: #{forward.2} parent=39 // pred_region
          %258 = dma.done %s251, 128
        $region44: #{forward.2} parent=39 // pred_fallthru
          _
        // Predicated region
        $region45: #{forward.2} parent=39 // pred_check
          %p259 = pneg %p66
        $region46: #{forward.2} parent=39 // pred_check_branch
          %261 = sbr.rel (%p259) target = $region48
        $region47: #{forward.2} parent=39 // pred_region
          %262 = dma.done [#allocation6], 384
        $region48: #{forward.2} parent=39 // pred_fallthru
          _
        // Predicated region
        $region49: #{forward.2} parent=39 // pred_check
          %p263 = pneg %p87
        $region50: #{forward.2} parent=39 // pred_check_branch
          %265 = sbr.rel (%p263) target = $region52
        $region51: #{forward.2} parent=39 // pred_region
          %266 = dma.done [#allocation6], 16
        $region52: #{forward.2} parent=39 // pred_fallthru
          _
        // Predicated region
        $region53: #{forward.2} parent=39 // pred_check
          %p267 = pneg %p108
        $region54: #{forward.2} parent=39 // pred_check_branch
          %269 = sbr.rel (%p267) target = $region56
        $region55: #{forward.2} parent=39 // pred_region
          %270 = dma.done [#allocation9], 512
        $region56: #{forward.2} parent=39 // pred_fallthru
          _
        // Predicated region
        $region57: #{forward.2} parent=39 // pred_check
          %p271 = pneg %p129
        $region58: #{forward.2} parent=39 // pred_check_branch
          %273 = sbr.rel (%p271) target = $region60
        $region59: #{forward.2} parent=39 // pred_region
          %274 = dma.done [#allocation9], 16
        $region60: #{forward.2} parent=39 // pred_fallthru
          _
        %s275 = sand.u32 %s32, 1
        %s276 = scalar_lea.sflag [#allocation3], %s275
        %s277 = sand.u32 %s32, 1
        %s278 = smul.addr %s277, 8
        %s279 = scalar_lea.vmem [#allocation2], %s278
        %p280 = pneg %p45
        %p281 = pneg %p42
        %p282 = pneg %p66
        %p283 = pneg %p63
        %p284 = pneg %p87
        %p285 = pneg %p84
        %p286 = pneg %p108
        %p287 = pneg %p105
        %p288 = pneg %p129
        %p289 = pneg %p126
        %p290 = pneg %p155
        %p291 = pneg %p152
        %s292 = sand.u32 %s142, 1
        %s293 = scalar_lea.sflag [#allocation4], %s292
        %s294 = sand.u32 %s142, 1
        %s295 = smul.addr %s294, 16
        %s296 = scalar_lea.vmem [#allocation11], %s295
        %s297 = smul.u32 2, %s24
        %s298 = smul.u32 2, %s24
        %v300 = vld [vmem:[%s254] sm:$0xf]
        %v301 = vld [vmem:[%s254 + $0x4] sm:$0xf]
        %v302 = vld [vmem:[#allocation5] sm:$0xf]
        %v303 = vld [vmem:[#allocation5 + $0x4] sm:$0xf]
        %v304 = vld [vmem:[#allocation5 + $0x8] sm:$0xf]
        %v305 = vld [vmem:[#allocation5 + $0xc] sm:$0xf]
        %v306 = vld [vmem:[#allocation5 + $0x10] sm:$0xf]
        %v307 = vld [vmem:[#allocation5 + $0x14] sm:$0xf]
        %v308 = vld [vmem:[#allocation7] sm:$0x1]
        %v310 = vlaneseq
        %v311 = vshrl.u32 %v310, 7
        %v312 = vsub.s32 0, %v311
        %v313 = vrot.slane %v308, %v312
        %v317 = vunpack.c.l.b16 %v300
        %v318 = vunpack.c.l.b16 %v301
        %v319 = vpack.c.b16 %v318, %v317
        %v326 = vunpack.c.l.b16 %v302
        %v327 = vunpack.c.l.b16 %v303
        %v328 = vunpack.c.l.b16 %v304
        %v329 = vunpack.c.l.b16 %v305
        %v330 = vunpack.c.l.b16 %v306
        %v331 = vunpack.c.l.b16 %v307
        %v332 = vpack.c.b16 %v327, %v326
        %v333 = vpack.c.b16 %v329, %v328
        %v334 = vpack.c.b16 %v331, %v330
        %vm338 = vcmask 392192
        %v340 = vsel %vm338, %v319, 0
        %342 = vmatprep.subr.bf16.mxu0 0
        %343 = vmatpush1.bf16.msra.mxu0 %v332
        %344 = vmatprep.subr.bf16.mxu0 0
        %345 = vmatpush1.bf16.msra.mxu0 %v333
        %346 = vmatprep.subr.bf16.mxu0 0
        %347 = vmatpush1.bf16.msra.mxu0 %v334
        %348 = vmatprep.subr.bf16.mxu0 0
        %349 = vmatpush1.bf16.msra.mxu0 0
        %350 = vmatprep.subr.bf16.mxu0 0
        %351 = vmatpush1.bf16.msra.mxu0 0
        %352 = vmatprep.subr.bf16.mxu0 0
        %353 = vmatpush1.bf16.msra.mxu0 0
        %354 = vmatprep.subr.bf16.mxu0 0
        %355 = vmatpush1.bf16.msra.mxu0 0
        %356 = vmatprep.subr.bf16.mxu0 0
        %357 = vmatpush1.bf16.msra.mxu0 0
        %358 = vmatprep.subr.bf16.mxu0 0
        %359 = vmatpush1.bf16.msra.mxu0 0
        %360 = vmatprep.subr.bf16.mxu0 0
        %361 = vmatpush1.bf16.msra.mxu0 0
        %362 = vmatprep.subr.bf16.mxu0 0
        %363 = vmatpush1.bf16.msra.mxu0 0
        %364 = vmatprep.subr.bf16.mxu0 0
        %365 = vmatpush1.bf16.msra.mxu0 0
        %366 = vmatprep.subr.bf16.mxu0 0
        %367 = vmatpush1.bf16.msra.mxu0 0
        %368 = vmatprep.subr.bf16.mxu0 0
        %369 = vmatpush1.bf16.msra.mxu0 0
        %370 = vmatprep.subr.bf16.mxu0 0
        %371 = vmatpush1.bf16.msra.mxu0 0
        %372 = vmatprep.subr.bf16.mxu0 0
        %373 = vmatpush1.bf16.msra.mxu0 0
        %374 = vmatprep.mubr.bf16.mxu0 0
        %375 = vmatmul.mubr.bf16.gmra.mrb[0].mxu0 %v340
        %v376 = vpop.f32.mrb[0].mxu0
        %v377 = vadd.f32 %v313, %v376
        %v378 = vpop.f32.mrb[0].mxu0
        %v379 = vpop.f32.mrb[0].mxu0
        %v380 = vadd.f32 %v313, %v379
        %v381 = vpop.f32.mrb[0].mxu0
        %382 = vdwg.mxu0
        %v383 = vpack.c.bf16 %v380, %v377
        %v384 = vld [vmem:[#allocation8] sm:$0xf]
        %v385 = vld [vmem:[#allocation8 + $0x4] sm:$0xf]
        %v386 = vld [vmem:[#allocation8 + $0x8] sm:$0xf]
        %v387 = vld [vmem:[#allocation8 + $0xc] sm:$0xf]
        %v388 = vld [vmem:[#allocation8 + $0x10] sm:$0xf]
        %v389 = vld [vmem:[#allocation8 + $0x14] sm:$0xf]
        %v390 = vld [vmem:[#allocation8 + $0x18] sm:$0xf]
        %v391 = vld [vmem:[#allocation8 + $0x1c] sm:$0xf]
        %v392 = vld [vmem:[#allocation10] sm:$0x1]
        %v394 = vlaneseq
        %v395 = vshrl.u32 %v394, 7
        %v396 = vsub.s32 0, %v395
        %v397 = vrot.slane %v392, %v396
        %v407 = vunpack.c.l.b16 %v384
        %v408 = vunpack.c.l.b16 %v385
        %v409 = vunpack.c.l.b16 %v386
        %v410 = vunpack.c.l.b16 %v387
        %v411 = vunpack.c.l.b16 %v388
        %v412 = vunpack.c.l.b16 %v389
        %v413 = vunpack.c.l.b16 %v390
        %v414 = vunpack.c.l.b16 %v391
        %v415 = vpack.c.b16 %v408, %v407
        %v416 = vpack.c.b16 %v410, %v409
        %v417 = vpack.c.b16 %v412, %v411
        %v418 = vpack.c.b16 %v414, %v413
        %vm423 = vcmask 523264
        %v425 = vsel %vm423, %v383, 0
        %427 = vmatprep.subr.bf16.mxu0 0
        %428 = vmatpush1.bf16.msra.mxu0 %v415
        %429 = vmatprep.subr.bf16.mxu0 0
        %430 = vmatpush1.bf16.msra.mxu0 %v416
        %431 = vmatprep.subr.bf16.mxu0 0
        %432 = vmatpush1.bf16.msra.mxu0 %v417
        %433 = vmatprep.subr.bf16.mxu0 0
        %434 = vmatpush1.bf16.msra.mxu0 %v418
        %435 = vmatprep.subr.bf16.mxu0 0
        %436 = vmatpush1.bf16.msra.mxu0 0
        %437 = vmatprep.subr.bf16.mxu0 0
        %438 = vmatpush1.bf16.msra.mxu0 0
        %439 = vmatprep.subr.bf16.mxu0 0
        %440 = vmatpush1.bf16.msra.mxu0 0
        %441 = vmatprep.subr.bf16.mxu0 0
        %442 = vmatpush1.bf16.msra.mxu0 0
        %443 = vmatprep.subr.bf16.mxu0 0
        %444 = vmatpush1.bf16.msra.mxu0 0
        %445 = vmatprep.subr.bf16.mxu0 0
        %446 = vmatpush1.bf16.msra.mxu0 0
        %447 = vmatprep.subr.bf16.mxu0 0
        %448 = vmatpush1.bf16.msra.mxu0 0
        %449 = vmatprep.subr.bf16.mxu0 0
        %450 = vmatpush1.bf16.msra.mxu0 0
        %451 = vmatprep.subr.bf16.mxu0 0
        %452 = vmatpush1.bf16.msra.mxu0 0
        %453 = vmatprep.subr.bf16.mxu0 0
        %454 = vmatpush1.bf16.msra.mxu0 0
        %455 = vmatprep.subr.bf16.mxu0 0
        %456 = vmatpush1.bf16.msra.mxu0 0
        %457 = vmatprep.subr.bf16.mxu0 0
        %458 = vmatpush1.bf16.msra.mxu0 0
        %459 = vmatprep.mubr.bf16.mxu0 0
        %460 = vmatmul.mubr.bf16.gmra.mrb[0].mxu0 %v425
        %v461 = vpop.f32.mrb[0].mxu0
        %v462 = vadd.f32 %v397, %v461
        %v463 = vpop.f32.mrb[0].mxu0
        %v464 = vpop.f32.mrb[0].mxu0
        %v465 = vadd.f32 %v397, %v464
        %v466 = vpop.f32.mrb[0].mxu0
        %467 = vdwg.mxu0
        %468 = vst [vmem:[%s296] sm:$0xff] %v462
        %469 = vst [vmem:[%s296 + $0x8] sm:$0xff] %v465
        %s470 = sand.u32 %s142, 1
        %s471 = scalar_lea.sflag [#allocation4], %s470
        %s472 = sand.u32 %s142, 1
        %s473 = smul.addr %s472, 16
        %s474 = scalar_lea.vmem [#allocation11], %s473
        // Predicated region
        $region61: #{forward.2} parent=39 // pred_check
          %p475 = pneg %p152
        $region62: #{forward.2} parent=39 // pred_check_branch
          %477 = sbr.rel (%p475) target = $region64
        $region63: #{forward.2} parent=39 // pred_region
          %s478 = smul.u32 2, %s24
          %s480 = ssub.s32 256, 256
          %481 = vsyncadd %s471, %s480
          %s482 = smul.addr %s478, 128
          %s483 = scalar_lea.hbm %s5, %s482
          %s484 = sshll.u32 %s474, 4
          %s485 = int_to_ptr.vmem [resolvable:$true] %s484
          %490 = dma.vmem_to_hbm [thread:$0]  %s485, 256, %s483, %s471, 128, 128, 8
        $region64: #{forward.2} parent=39 // pred_fallthru
          _
      $region40: #{forward.2} parent=5 // pred_fallthru
        _
      %p491 = scmp.le.s32.totalorder 2, %s19
      // Predicated region
      $region65: #{forward.2} parent=5 // pred_check
        %p492 = pneg %p491
      $region66: #{forward.2} parent=5 // pred_check_branch
        %494 = sbr.rel (%p492) target = $region68
      $region67: #{forward.2} parent=5 // pred_region
        %s495 = ssub.s32 %s19, 2
        // Predicated region
        $region69: #{forward.2} parent=67 // pred_check
          %p496 = pneg %p158
        $region70: #{forward.2} parent=67 // pred_check_branch
          %498 = sbr.rel (%p496) target = $region72
        $region71: #{forward.2} parent=67 // pred_region
          %s499 = sand.u32 %s143, 1
          %s500 = scalar_lea.sflag [#allocation4], %s499
          %s501 = sand.u32 %s143, 1
          %s502 = smul.addr %s501, 16
          %s503 = scalar_lea.vmem [#allocation11], %s502
          %504 = dma.done %s500, 256
        $region72: #{forward.2} parent=67 // pred_fallthru
          _
      $region68: #{forward.2} parent=5 // pred_fallthru
        _
    $region6: #{forward.2} parent=1 // loop_footer
      %s23 = sadd.s32 1, %s19
    $region7: #{forward.2} parent=1 // loop_footer_branch
      %18 = sbr.rel target = $region3
    $region8: #{forward.2} parent=1 // loop_exit
      _
    %505 = vsyncpa [#allocation3], 1
    %s506 = scalar_lea.sflag [#allocation3], 1
    %507 = vsyncpa %s506, 1
    %508 = vsyncpa [#allocation6], 1
    %509 = vsyncpa [#allocation9], 1
    %510 = vsyncpa [#allocation4], 1
    %s511 = scalar_lea.sflag [#allocation4], 1
    %512 = vsyncpa %s511, 1

// kernel: forward.3
$region0: #{forward.3}
  #allocation0 [shape = 'u32[]', space=smem, size = 0x4, offset = 0x4, fixed_abs, tag = 'smem constant byte address 0x4 - core index']
  #allocation1 [shape = 'u32[144,128]{1,0:T(1,128)}', space=vmem, size = 0x12000, scoped, tag = 'internal scratch']
  #allocation2 [shape = 'f32[32,1]{1,0:T(8,128)}', space=vmem, size = 0x4000, scoped, tag = 'scratch operand']
  #allocation3 [shape = 'f32[32,1]{1,0:T(8,128)}', space=vmem, size = 0x4000, scoped, tag = 'scratch operand']
  #allocation4 [shape = 'f32[32,1]{1,0:T(8,128)}', space=vmem, size = 0x4000, scoped, tag = 'scratch operand']
  %s0 = inlined_call_operand.hbm [shape: bf16[62,32], index: 0, kind: input, shape index: {}]
  %s1 = inlined_call_operand.hbm [shape: bf16[32,256], index: 1, kind: input, shape index: {}]
  %s2 = inlined_call_operand.hbm [shape: s32[62,1], index: 2, kind: input, shape index: {}]
  %s3 = inlined_call_operand.hbm [shape: f32[62,1], index: 3, kind: output, shape index: {}]
  %s4 = sld [smem:[#allocation0]]
  $region65: #{forward.3} parent=0
    _
  %s6 = ssub.s32 1, %s4
  %s7 = scalar_select 0, %s6, %s4
  $region1: #{forward.3} parent=0
    #allocation5 [shape = 'u8[16384]{0}', space=vmem, size = 0x4000, scoped, tag = 'input window, operand 0']
    #allocation6 [shape = 's32[2]{0}', space=sflag, size = 0x8, scoped, tag = 'scoped memory for forward.3']
    #allocation7 [shape = 's32[2]{0}', space=sflag, size = 0x8, scoped, tag = 'scoped memory for forward.3']
    #allocation8 [shape = 'u8[16384]{0}', space=vmem, size = 0x4000, scoped, tag = 'input window, operand 1, single buffered']
    #allocation9 [shape = 's32[1]{0}', space=sflag, size = 0x4, scoped, tag = 'scoped memory for forward.3']
    #allocation10 [shape = 'u8[32768]{0}', space=vmem, size = 0x8000, scoped, tag = 'input window, operand 2']
    #allocation11 [shape = 'u8[32768]{0}', space=vmem, size = 0x8000, scoped, tag = 'output window, operand 0']
    %8 = vsyncpa [#allocation6], 0
    %s9 = scalar_lea.sflag [#allocation6], 1
    %10 = vsyncpa %s9, 0
    %11 = vsyncpa [#allocation9], 0
    %12 = vsyncpa [#allocation7], 0
    %s13 = scalar_lea.sflag [#allocation7], 1
    %14 = vsyncpa %s13, 0
    loop: start=0, step=1, limit=4
    $region2: #{forward.3} parent=1 // loop_pre_header
      _
    $region3: #{forward.3} parent=1 // loop_header
      %s16 = sphi 0, %s20
      %p17 = scmp.ge.s32.totalorder %s16, 4
      %s23 = sphi 0, %s35
      %s24 = sphi 0, %s31
      %s25 = sphi 0, %s23
      %s26 = sphi 0, %s24
      %s27 = sphi 0, %s25
      %s28 = sphi 0, %s26
      %s38 = sphi 0, %s40
      %s41 = sphi 0, %s38
      %s42 = sphi 0, %s41
      %s58 = sphi 0, %s42
      %s64 = sphi 0, %s66
      %s67 = sphi 0, %s64
      %s68 = sphi 0, %s67
      %s84 = sphi 0, %s68
      %s90 = sphi 0, %s92
      %s93 = sphi 0, %s90
      %s94 = sphi 0, %s93
      %s110 = sphi 0, %s94
      %s116 = sphi 0, %s118
      %s119 = sphi 0, %s116
      %s120 = sphi 0, %s119
      %s136 = sphi 0, %s120
    $region4: #{forward.3} parent=1 // loop_header_branch
      %19 = sbr.rel (%p17) target = $region8
    $region5: #{forward.3} parent=1 // loop_body
      %s21 = ssub.s32 %s16, 1
      %s22 = ssub.s32 %s16, 2
      %s29 = sadd.s32 1, %s24
      %p30 = scmp.ge.s32.totalorder %s29, 1
      %s31 = scalar_select %p30, 0, %s29
      %s32 = sadd.s32 1, %s23
      %s33 = scalar_select %p30, %s32, %s23
      %p34 = scmp.ge.s32.totalorder %s33, 2
      %s35 = scalar_select %p34, 0, %s33
      %s36 = ssub.s32 %s23, %s35
      %p37 = scmp.eq.s32.totalorder %s36, 0
      %s39 = sadd.s32 %s38, 1
      %s40 = scalar_select %p37, %s38, %s39
      %p43 = pneg %p37
      %p44 = scmp.eq.s32.totalorder %s16, 1
      %p45 = por %p43, %p44
      %p46 = scmp.ne.s32.totalorder %s38, %s41
      %p47 = scmp.eq.s32.totalorder %s16, 0
      %p48 = por %p46, %p47
      %p49 = scmp.ne.s32.totalorder %s38, %s41
      %p50 = scmp.eq.s32.totalorder %s21, 1
      %p51 = por %p49, %p50
      %p52 = scmp.ne.s32.totalorder %s41, %s42
      %p53 = scmp.eq.s32.totalorder %s21, 0
      %p54 = por %p52, %p53
      %p55 = scmp.ne.s32.totalorder %s41, %s42
      %p56 = scmp.eq.s32.totalorder %s22, 1
      %p57 = por %p55, %p56
      %p59 = scmp.ne.s32.totalorder %s42, %s58
      %p60 = scmp.eq.s32.totalorder %s22, 0
      %p61 = por %p59, %p60
      %s62 = ssub.s32 %s24, %s31
      %p63 = scmp.eq.s32.totalorder %s62, 0
      %s65 = sadd.s32 %s64, 1
      %s66 = scalar_select %p63, %s64, %s65
      %p69 = pneg %p63
      %p70 = scmp.eq.s32.totalorder %s16, 1
      %p71 = por %p69, %p70
      %p72 = scmp.ne.s32.totalorder %s64, %s67
      %p73 = scmp.eq.s32.totalorder %s16, 0
      %p74 = por %p72, %p73
      %p75 = scmp.ne.s32.totalorder %s64, %s67
      %p76 = scmp.eq.s32.totalorder %s21, 1
      %p77 = por %p75, %p76
      %p78 = scmp.ne.s32.totalorder %s67, %s68
      %p79 = scmp.eq.s32.totalorder %s21, 0
      %p80 = por %p78, %p79
      %p81 = scmp.ne.s32.totalorder %s67, %s68
      %p82 = scmp.eq.s32.totalorder %s22, 1
      %p83 = por %p81, %p82
      %p85 = scmp.ne.s32.totalorder %s68, %s84
      %p86 = scmp.eq.s32.totalorder %s22, 0
      %p87 = por %p85, %p86
      %s88 = ssub.s32 %s23, %s35
      %p89 = scmp.eq.s32.totalorder %s88, 0
      %s91 = sadd.s32 %s90, 1
      %s92 = scalar_select %p89, %s90, %s91
      %p95 = pneg %p89
      %p96 = scmp.eq.s32.totalorder %s16, 1
      %p97 = por %p95, %p96
      %p98 = scmp.ne.s32.totalorder %s90, %s93
      %p99 = scmp.eq.s32.totalorder %s16, 0
      %p100 = por %p98, %p99
      %p101 = scmp.ne.s32.totalorder %s90, %s93
      %p102 = scmp.eq.s32.totalorder %s21, 1
      %p103 = por %p101, %p102
      %p104 = scmp.ne.s32.totalorder %s93, %s94
      %p105 = scmp.eq.s32.totalorder %s21, 0
      %p106 = por %p104, %p105
      %p107 = scmp.ne.s32.totalorder %s93, %s94
      %p108 = scmp.eq.s32.totalorder %s22, 1
      %p109 = por %p107, %p108
      %p111 = scmp.ne.s32.totalorder %s94, %s110
      %p112 = scmp.eq.s32.totalorder %s22, 0
      %p113 = por %p111, %p112
      %s114 = ssub.s32 %s23, %s35
      %p115 = scmp.eq.s32.totalorder %s114, 0
      %s117 = sadd.s32 %s116, 1
      %s118 = scalar_select %p115, %s116, %s117
      %p121 = pneg %p115
      %p122 = scmp.eq.s32.totalorder %s16, 1
      %p123 = por %p121, %p122
      %p124 = scmp.ne.s32.totalorder %s116, %s119
      %p125 = scmp.eq.s32.totalorder %s16, 0
      %p126 = por %p124, %p125
      %p127 = scmp.ne.s32.totalorder %s116, %s119
      %p128 = scmp.eq.s32.totalorder %s21, 1
      %p129 = por %p127, %p128
      %p130 = scmp.ne.s32.totalorder %s119, %s120
      %p131 = scmp.eq.s32.totalorder %s21, 0
      %p132 = por %p130, %p131
      %p133 = scmp.ne.s32.totalorder %s119, %s120
      %p134 = scmp.eq.s32.totalorder %s22, 1
      %p135 = por %p133, %p134
      %p137 = scmp.ne.s32.totalorder %s120, %s136
      %p138 = scmp.eq.s32.totalorder %s22, 0
      %p139 = por %p137, %p138
      %p140 = scmp.le.s32.totalorder 1, %s16
      %p141 = scmp.lt.s32.totalorder %s16, 3
      %p142 = pnand %p140, %p141
      %p143 = pneg %p142
      // Predicated region
      $region9: #{forward.3} parent=5 // pred_check
        _
      $region10: #{forward.3} parent=5 // pred_check_branch
        %145 = sbr.rel (%p142) target = $region12
      $region11: #{forward.3} parent=5 // pred_region
        %s146 = ssub.s32 %s16, 1
        // Predicated region
        $region13: #{forward.3} parent=11 // pred_check
          %p147 = pneg %p80
        $region14: #{forward.3} parent=11 // pred_check_branch
          %149 = sbr.rel (%p147) target = $region16
        $region15: #{forward.3} parent=11 // pred_region
          %s150 = smul.u32 2, %s26
          %s152 = ssub.s32 512, 512
          %153 = vsyncadd [#allocation9], %s152
          %s154 = smul.addr %s150, 64
          %s155 = scalar_lea.hbm %s1, %s154
          %s156 = sshll.u32 [#allocation8], 4
          %s157 = int_to_ptr.vmem [resolvable:$true] %s156
          %162 = dma.hbm_to_vmem [thread:$0]  %s155, 512, %s157, [#allocation9], 128, 128, 8
        $region16: #{forward.3} parent=11 // pred_fallthru
          _
      $region12: #{forward.3} parent=5 // pred_fallthru
        _
      %p163 = scmp.lt.s32.totalorder %s16, 2
      // Predicated region
      $region17: #{forward.3} parent=5 // pred_check
        %p164 = pneg %p163
      $region18: #{forward.3} parent=5 // pred_check_branch
        %166 = sbr.rel (%p164) target = $region20
      $region19: #{forward.3} parent=5 // pred_region
        // Predicated region
        $region21: #{forward.3} parent=19 // pred_check
          %p167 = pneg %p48
        $region22: #{forward.3} parent=19 // pred_check_branch
          %169 = sbr.rel (%p167) target = $region24
        $region23: #{forward.3} parent=19 // pred_region
          %s170 = sand.u32 %s16, 1
          %s171 = scalar_lea.sflag [#allocation6], %s170
          %s172 = sand.u32 %s38, 1
          %s173 = smul.addr %s172, 16
          %s174 = scalar_lea.vmem [#allocation5], %s173
          %s175 = smul.u32 4, %s23
          %s177 = ssub.s32 256, 256
          %178 = vsyncadd %s171, %s177
          %s179 = smul.addr %s175, 64
          %s180 = scalar_lea.hbm %s0, %s179
          %s181 = sshll.u32 %s174, 4
          %s182 = int_to_ptr.vmem [resolvable:$true] %s181
          %187 = dma.hbm_to_vmem [thread:$0]  %s180, 256, %s182, %s171, 64, 64, 4
        $region24: #{forward.3} parent=19 // pred_fallthru
          _
        // Predicated region
        $region25: #{forward.3} parent=19 // pred_check
          %p188 = pneg %p100
        $region26: #{forward.3} parent=19 // pred_check_branch
          %190 = sbr.rel (%p188) target = $region28
        $region27: #{forward.3} parent=19 // pred_region
          %s191 = sand.u32 %s16, 1
          %s192 = scalar_lea.sflag [#allocation6], %s191
          %s193 = sand.u32 %s90, 1
          %s194 = smul.addr %s193, 32
          %s195 = scalar_lea.vmem [#allocation10], %s194
          %s196 = smul.u32 4, %s23
          %s198 = ssub.s32 512, 512
          %199 = vsyncadd %s192, %s198
          %s200 = smul.addr %s196, 128
          %s201 = scalar_lea.hbm %s2, %s200
          %s202 = sshll.u32 %s195, 4
          %s203 = int_to_ptr.vmem [resolvable:$true] %s202
          %208 = dma.hbm_to_vmem [thread:$0]  %s201, 512, %s203, %s192, 128, 128, 8
        $region28: #{forward.3} parent=19 // pred_fallthru
          _
      $region20: #{forward.3} parent=5 // pred_fallthru
        _
      %p209 = scmp.le.s32.totalorder 1, %s16
      %p210 = scmp.lt.s32.totalorder %s16, 3
      %p211 = pnand %p209, %p210
      %p212 = pneg %p211
      // Predicated region
      $region29: #{forward.3} parent=5 // pred_check
        _
      $region30: #{forward.3} parent=5 // pred_check_branch
        %214 = sbr.rel (%p211) target = $region32
      $region31: #{forward.3} parent=5 // pred_region
        %s215 = ssub.s32 %s16, 1
        %s216 = sand.u32 %s21, 1
        %s217 = scalar_lea.sflag [#allocation6], %s216
        %s218 = sand.u32 %s41, 1
        %s219 = smul.addr %s218, 16
        %s220 = scalar_lea.vmem [#allocation5], %s219
        // Predicated region
        $region33: #{forward.3} parent=31 // pred_check
          %p221 = pneg %p54
        $region34: #{forward.3} parent=31 // pred_check_branch
          %223 = sbr.rel (%p221) target = $region36
        $region35: #{forward.3} parent=31 // pred_region
          %224 = dma.done %s217, 256
        $region36: #{forward.3} parent=31 // pred_fallthru
          _
        // Predicated region
        $region37: #{forward.3} parent=31 // pred_check
          %p225 = pneg %p80
        $region38: #{forward.3} parent=31 // pred_check_branch
          %227 = sbr.rel (%p225) target = $region40
        $region39: #{forward.3} parent=31 // pred_region
          %228 = dma.done [#allocation9], 512
        $region40: #{forward.3} parent=31 // pred_fallthru
          _
        %s229 = sand.u32 %s21, 1
        %s230 = scalar_lea.sflag [#allocation6], %s229
        %s231 = sand.u32 %s93, 1
        %s232 = smul.addr %s231, 32
        %s233 = scalar_lea.vmem [#allocation10], %s232
        // Predicated region
        $region41: #{forward.3} parent=31 // pred_check
          %p234 = pneg %p106
        $region42: #{forward.3} parent=31 // pred_check_branch
          %236 = sbr.rel (%p234) target = $region44
        $region43: #{forward.3} parent=31 // pred_region
          %237 = dma.done %s230, 512
        $region44: #{forward.3} parent=31 // pred_fallthru
          _
        %s238 = sand.u32 %s21, 1
        %s239 = scalar_lea.sflag [#allocation6], %s238
        %s240 = sand.u32 %s41, 1
        %s241 = smul.addr %s240, 16
        %s242 = scalar_lea.vmem [#allocation5], %s241
        %p243 = pneg %p54
        %p244 = pneg %p51
        %p245 = pneg %p80
        %p246 = pneg %p77
        %s247 = sand.u32 %s21, 1
        %s248 = scalar_lea.sflag [#allocation6], %s247
        %s249 = sand.u32 %s93, 1
        %s250 = smul.addr %s249, 32
        %s251 = scalar_lea.vmem [#allocation10], %s250
        %p252 = pneg %p106
        %p253 = pneg %p103
        %p254 = pneg %p132
        %p255 = pneg %p129
        %s256 = sand.u32 %s119, 1
        %s257 = scalar_lea.sflag [#allocation7], %s256
        %s258 = sand.u32 %s119, 1
        %s259 = smul.addr %s258, 32
        %s260 = scalar_lea.vmem [#allocation11], %s259
        %s261 = smul.u32 4, %s25
        %s262 = smul.u32 2, %s26
        %s263 = smul.u32 4, %s25
        %s264 = smul.u32 4, %s25
        %p266 = scmp.eq.s32.totalorder %s26, 0
        // Predicated region
        $region45: #{forward.3} parent=31 // pred_check
          %p267 = pneg %p266
        $region46: #{forward.3} parent=31 // pred_check_branch
          %269 = sbr.rel (%p267) target = $region48
        $region47: #{forward.3} parent=31 // pred_region
          %vm270 = vcmask 7168
          %271 = vst.msk [vmem:[#allocation2] sm:$0xff] %vm270, -inf
          %272 = vst.msk [vmem:[#allocation2 + $0x8] sm:$0xff] %vm270, -inf
          %273 = vst.msk [vmem:[#allocation2 + $0x10] sm:$0xff] %vm270, -inf
          %274 = vst.msk [vmem:[#allocation2 + $0x18] sm:$0xff] %vm270, -inf
          %275 = vst.msk [vmem:[#allocation3] sm:$0xff] %vm270, 0.0
          %276 = vst.msk [vmem:[#allocation3 + $0x8] sm:$0xff] %vm270, 0.0
          %277 = vst.msk [vmem:[#allocation3 + $0x10] sm:$0xff] %vm270, 0.0
          %278 = vst.msk [vmem:[#allocation3 + $0x18] sm:$0xff] %vm270, 0.0
          %279 = vst.msk [vmem:[#allocation4] sm:$0xff] %vm270, 0.0
          %280 = vst.msk [vmem:[#allocation4 + $0x8] sm:$0xff] %vm270, 0.0
          %281 = vst.msk [vmem:[#allocation4 + $0x10] sm:$0xff] %vm270, 0.0
          %282 = vst.msk [vmem:[#allocation4 + $0x18] sm:$0xff] %vm270, 0.0
        $region48: #{forward.3} parent=31 // pred_fallthru
          _
        %v283 = vld [vmem:[%s220] sm:$0xf]
        %v284 = vld [vmem:[%s220 + $0x4] sm:$0xf]
        %v285 = vld [vmem:[%s220 + $0x8] sm:$0xf]
        %v286 = vld [vmem:[%s220 + $0xc] sm:$0xf]
        %v287 = vld [vmem:[#allocation8] sm:$0xff]
        %v288 = vld [vmem:[#allocation8 + $0x8] sm:$0xff]
        %v289 = vld [vmem:[#allocation8 + $0x10] sm:$0xff]
        %v290 = vld [vmem:[#allocation8 + $0x18] sm:$0xff]
        %v295 = vunpack.c.l.b16 %v283
        %v296 = vunpack.c.l.b16 %v284
        %v297 = vunpack.c.l.b16 %v285
        %v298 = vunpack.c.l.b16 %v286
        %v299 = vpack.c.b16 %v296, %v295
        %v300 = vpack.c.b16 %v298, %v297
        %v305 = vunpack.c.l.b16 %v287
        %v306 = vunpack.c.h.b16 %v287
        %v307 = vunpack.c.l.b16 %v288
        %v308 = vunpack.c.h.b16 %v288
        %v309 = vunpack.c.l.b16 %v289
        %v310 = vunpack.c.h.b16 %v289
        %v311 = vunpack.c.l.b16 %v290
        %v312 = vunpack.c.h.b16 %v290
        %v313 = vpack.c.b16 %v307, %v305
        %v314 = vpack.c.b16 %v308, %v306
        %v315 = vpack.c.b16 %v311, %v309
        %v316 = vpack.c.b16 %v312, %v310
        %vm321 = vcmask 261120
        %v323 = vsel %vm321, %v299, 0
        %v326 = vsel %vm321, %v300, 0
        %328 = vmatprep.subr.bf16.mxu0 %v314
        %329 = vmatpush1.bf16.msra.mxu0 %v313
        %330 = vmatprep.subr.bf16.mxu0 %v316
        %331 = vmatpush1.bf16.msra.mxu0 %v315
        %332 = vmatprep.subr.bf16.mxu0 0
        %333 = vmatpush1.bf16.msra.mxu0 0
        %334 = vmatprep.subr.bf16.mxu0 0
        %335 = vmatpush1.bf16.msra.mxu0 0
        %336 = vmatprep.subr.bf16.mxu0 0
        %337 = vmatpush1.bf16.msra.mxu0 0
        %338 = vmatprep.subr.bf16.mxu0 0
        %339 = vmatpush1.bf16.msra.mxu0 0
        %340 = vmatprep.subr.bf16.mxu0 0
        %341 = vmatpush1.bf16.msra.mxu0 0
        %342 = vmatprep.subr.bf16.mxu0 0
        %343 = vmatpush1.bf16.msra.mxu0 0
        %344 = vmatprep.subr.bf16.mxu0 0
        %345 = vmatpush1.bf16.msra.mxu0 0
        %346 = vmatprep.subr.bf16.mxu0 0
        %347 = vmatpush1.bf16.msra.mxu0 0
        %348 = vmatprep.subr.bf16.mxu0 0
        %349 = vmatpush1.bf16.msra.mxu0 0
        %350 = vmatprep.subr.bf16.mxu0 0
        %351 = vmatpush1.bf16.msra.mxu0 0
        %352 = vmatprep.subr.bf16.mxu0 0
        %353 = vmatpush1.bf16.msra.mxu0 0
        %354 = vmatprep.subr.bf16.mxu0 0
        %355 = vmatpush1.bf16.msra.mxu0 0
        %356 = vmatprep.subr.bf16.mxu0 0
        %357 = vmatpush1.bf16.msra.mxu0 0
        %358 = vmatprep.subr.bf16.mxu0 0
        %359 = vmatpush1.bf16.msra.mxu0 0
        %360 = vmatprep.mubr.bf16.mxu0 0
        %361 = vmatmul.mubr.bf16.gmra.mrb[0].mxu0 %v323
        %v362 = vpop.f32.mrb[0].mxu0
        %v363 = vadd.f32 0.0, %v362
        %v364 = vpop.f32.mrb[0].mxu0
        %v365 = vadd.f32 0.0, %v364
        %v366 = vpop.f32.mrb[0].mxu0
        %v367 = vadd.f32 0.0, %v366
        %v368 = vpop.f32.mrb[0].mxu0
        %v369 = vadd.f32 0.0, %v368
        %370 = vmatprep.mubr.bf16.mxu0 0
        %371 = vmatmul.mubr.bf16.gmra.mrb[0].mxu0 %v326
        %v372 = vpop.f32.mrb[0].mxu0
        %v373 = vadd.f32 0.0, %v372
        %v374 = vpop.f32.mrb[0].mxu0
        %v375 = vadd.f32 0.0, %v374
        %v376 = vpop.f32.mrb[0].mxu0
        %v377 = vadd.f32 0.0, %v376
        %v378 = vpop.f32.mrb[0].mxu0
        %v379 = vadd.f32 0.0, %v378
        %380 = vdwg.mxu0
        %s381 = smul.u32 %s26, 256
        %v382 = vlaneseq
        %v383 = vand.u32 %v382, 127
        %v384 = vadd.s32 %v383, 128
        %v385 = vstv %s381
        %v386 = vadd.s32 %v385, %v383
        %v387 = vadd.s32 %v385, %v384
        %v388 = vld [vmem:[#allocation4] sm:$0xff]
        %v389 = vld [vmem:[#allocation4 + $0x8] sm:$0xff]
        %v390 = vld [vmem:[#allocation4 + $0x10] sm:$0xff]
        %v391 = vld [vmem:[#allocation4 + $0x18] sm:$0xff]
        %v392 = vld [vmem:[%s233] sm:$0xff]
        %v393 = vld [vmem:[%s233 + $0x8] sm:$0xff]
        %v394 = vld [vmem:[%s233 + $0x10] sm:$0xff]
        %v395 = vld [vmem:[%s233 + $0x18] sm:$0xff]
        %396 = vset.pattern.permute.xlu0 0
        %397 = vperm.xlu0 %396, %v392
        %v398 = vpop.permute.xlu0 %397
        %399 = vset.pattern.permute.xlu0 0
        %400 = vperm.xlu0 %399, %v393
        %v401 = vpop.permute.xlu0 %400
        %402 = vset.pattern.permute.xlu0 0
        %403 = vperm.xlu0 %402, %v394
        %v404 = vpop.permute.xlu0 %403
        %405 = vset.pattern.permute.xlu0 0
        %406 = vperm.xlu0 %405, %v395
        %v407 = vpop.permute.xlu0 %406
        %vm408 = vcmp.eq.s32.totalorder %v386, %v398
        %vm409 = vcmp.eq.s32.totalorder %v387, %v398
        %vm410 = vcmp.eq.s32.totalorder %v386, %v401
        %vm411 = vcmp.eq.s32.totalorder %v387, %v401
        %vm412 = vcmp.eq.s32.totalorder %v386, %v404
        %vm413 = vcmp.eq.s32.totalorder %v387, %v404
        %vm414 = vcmp.eq.s32.totalorder %v386, %v407
        %vm415 = vcmp.eq.s32.totalorder %v387, %v407
        %v416 = vsel %vm408, %v363, 0.0
        %v417 = vsel %vm409, %v365, 0.0
        %v418 = vsel %vm410, %v367, 0.0
        %v419 = vsel %vm411, %v369, 0.0
        %v420 = vsel %vm412, %v373, 0.0
        %v421 = vsel %vm413, %v375, 0.0
        %v422 = vsel %vm414, %v377, 0.0
        %v423 = vsel %vm415, %v379, 0.0
        %v424 = vadd.f32 %v416, %v417
        %425 = vadd.xlane.f32.xlu0 %v424
        %v426 = vpop.xlane.xlu0 %425
        %v427 = vadd.f32 %v418, %v419
        %428 = vadd.xlane.f32.xlu0 %v427
        %v429 = vpop.xlane.xlu0 %428
        %v430 = vadd.f32 %v420, %v421
        %431 = vadd.xlane.f32.xlu0 %v430
        %v432 = vpop.xlane.xlu0 %431
        %v433 = vadd.f32 %v422, %v423
        %434 = vadd.xlane.f32.xlu0 %v433
        %v435 = vpop.xlane.xlu0 %434
        %v436 = vadd.f32 %v388, %v426
        %v437 = vadd.f32 %v389, %v429
        %v438 = vadd.f32 %v390, %v432
        %v439 = vadd.f32 %v391, %v435
        %vm440 = vcmask 7168
        %441 = vst.msk [vmem:[#allocation4] sm:$0xff] %vm440, %v436
        %442 = vst.msk [vmem:[#allocation4 + $0x8] sm:$0xff] %vm440, %v437
        %443 = vst.msk [vmem:[#allocation4 + $0x10] sm:$0xff] %vm440, %v438
        %444 = vst.msk [vmem:[#allocation4 + $0x18] sm:$0xff] %vm440, %v439
        %v445 = vld [vmem:[#allocation2] sm:$0xff]
        %v446 = vld [vmem:[#allocation2 + $0x8] sm:$0xff]
        %v447 = vld [vmem:[#allocation2 + $0x10] sm:$0xff]
        %v448 = vld [vmem:[#allocation2 + $0x18] sm:$0xff]
        %v449 = vmax.f32 %v363, %v365
        %450 = vmax.xlane.f32.xlu0 %v449
        %v451 = vpop.xlane.xlu0 %450
        %v452 = vmax.f32 %v367, %v369
        %453 = vmax.xlane.f32.xlu0 %v452
        %v454 = vpop.xlane.xlu0 %453
        %v455 = vmax.f32 %v373, %v375
        %456 = vmax.xlane.f32.xlu0 %v455
        %v457 = vpop.xlane.xlu0 %456
        %v458 = vmax.f32 %v377, %v379
        %459 = vmax.xlane.f32.xlu0 %v458
        %v460 = vpop.xlane.xlu0 %459
        %v461 = vmax.f32 %v445, %v451
        %v462 = vmax.f32 %v446, %v454
        %v463 = vmax.f32 %v447, %v457
        %v464 = vmax.f32 %v448, %v460
        %v465 = vsub.f32 %v445, %v461
        %v466 = vsub.f32 %v446, %v462
        %v467 = vsub.f32 %v447, %v463
        %v468 = vsub.f32 %v448, %v464
        %v469 = vmul.f32 %v465, 1.442695
        %v470 = vpow.pop %v469
        %v471 = vmul.f32 %v466, 1.442695
        %v472 = vpow.pop %v471
        %v473 = vmul.f32 %v467, 1.442695
        %v474 = vpow.pop %v473
        %v475 = vmul.f32 %v468, 1.442695
        %v476 = vpow.pop %v475
        %v477 = vld [vmem:[#allocation3] sm:$0xff]
        %v478 = vld [vmem:[#allocation3 + $0x8] sm:$0xff]
        %v479 = vld [vmem:[#allocation3 + $0x10] sm:$0xff]
        %v480 = vld [vmem:[#allocation3 + $0x18] sm:$0xff]
        %v481 = vmul.f32 %v470, %v477
        %v482 = vmul.f32 %v472, %v478
        %v483 = vmul.f32 %v474, %v479
        %v484 = vmul.f32 %v476, %v480
        %486 = vset.pattern.permute.xlu0 0
        %487 = vperm.xlu0 %486, %v461
        %v488 = vpop.permute.xlu0 %487
        %491 = vset.pattern.permute.xlu0 0
        %492 = vperm.xlu0 %491, %v462
        %v493 = vpop.permute.xlu0 %492
        %496 = vset.pattern.permute.xlu0 0
        %497 = vperm.xlu0 %496, %v463
        %v498 = vpop.permute.xlu0 %497
        %501 = vset.pattern.permute.xlu0 0
        %502 = vperm.xlu0 %501, %v464
        %v503 = vpop.permute.xlu0 %502
        %v505 = vsub.f32 %v363, %v488
        %v506 = vsub.f32 %v365, %v488
        %v507 = vsub.f32 %v367, %v493
        %v508 = vsub.f32 %v369, %v493
        %v509 = vsub.f32 %v373, %v498
        %v510 = vsub.f32 %v375, %v498
        %v511 = vsub.f32 %v377, %v503
        %v512 = vsub.f32 %v379, %v503
        %v513 = vmul.f32 %v505, 1.442695
        %v514 = vpow.pop %v513
        %v515 = vmul.f32 %v506, 1.442695
        %v516 = vpow.pop %v515
        %v517 = vmul.f32 %v507, 1.442695
        %v518 = vpow.pop %v517
        %v519 = vmul.f32 %v508, 1.442695
        %v520 = vpow.pop %v519
        %v521 = vmul.f32 %v509, 1.442695
        %v522 = vpow.pop %v521
        %v523 = vmul.f32 %v510, 1.442695
        %v524 = vpow.pop %v523
        %v525 = vmul.f32 %v511, 1.442695
        %v526 = vpow.pop %v525
        %v527 = vmul.f32 %v512, 1.442695
        %v528 = vpow.pop %v527
        %v529 = vadd.f32 %v514, %v516
        %530 = vadd.xlane.f32.xlu0 %v529
        %v531 = vpop.xlane.xlu0 %530
        %v532 = vadd.f32 %v518, %v520
        %533 = vadd.xlane.f32.xlu0 %v532
        %v534 = vpop.xlane.xlu0 %533
        %v535 = vadd.f32 %v522, %v524
        %536 = vadd.xlane.f32.xlu0 %v535
        %v537 = vpop.xlane.xlu0 %536
        %v538 = vadd.f32 %v526, %v528
        %539 = vadd.xlane.f32.xlu0 %v538
        %v540 = vpop.xlane.xlu0 %539
        %v541 = vadd.f32 %v481, %v531
        %v542 = vadd.f32 %v482, %v534
        %v543 = vadd.f32 %v483, %v537
        %v544 = vadd.f32 %v484, %v540
        %545 = vst.msk [vmem:[#allocation3] sm:$0xff] %vm440, %v541
        %546 = vst.msk [vmem:[#allocation3 + $0x8] sm:$0xff] %vm440, %v542
        %547 = vst.msk [vmem:[#allocation3 + $0x10] sm:$0xff] %vm440, %v543
        %548 = vst.msk [vmem:[#allocation3 + $0x18] sm:$0xff] %vm440, %v544
        %549 = vst.msk [vmem:[#allocation2] sm:$0xff] %vm440, %v461
        %550 = vst.msk [vmem:[#allocation2 + $0x8] sm:$0xff] %vm440, %v462
        %551 = vst.msk [vmem:[#allocation2 + $0x10] sm:$0xff] %vm440, %v463
        %552 = vst.msk [vmem:[#allocation2 + $0x18] sm:$0xff] %vm440, %v464
        // Predicated region
        $region49: #{forward.3} parent=31 // pred_check
          %p553 = pneg %p266
        $region50: #{forward.3} parent=31 // pred_check_branch
          %555 = sbr.rel (%p553) target = $region52
        $region51: #{forward.3} parent=31 // pred_region
          %v556 = vld [vmem:[#allocation2] sm:$0xff]
          %v557 = vld [vmem:[#allocation2 + $0x8] sm:$0xff]
          %v558 = vld [vmem:[#allocation2 + $0x10] sm:$0xff]
          %v559 = vld [vmem:[#allocation2 + $0x18] sm:$0xff]
          %v560 = vld [vmem:[#allocation3] sm:$0xff]
          %v561 = vld [vmem:[#allocation3 + $0x8] sm:$0xff]
          %v562 = vld [vmem:[#allocation3 + $0x10] sm:$0xff]
          %v563 = vld [vmem:[#allocation3 + $0x18] sm:$0xff]
          %v564 = vlog2.pop %v560
          %v565 = vmul.f32 %v564, 0.6931472
          %v566 = vlog2.pop %v561
          %v567 = vmul.f32 %v566, 0.6931472
          %v568 = vlog2.pop %v562
          %v569 = vmul.f32 %v568, 0.6931472
          %v570 = vlog2.pop %v563
          %v571 = vmul.f32 %v570, 0.6931472
          %v572 = vadd.f32 %v556, %v565
          %v573 = vadd.f32 %v557, %v567
          %v574 = vadd.f32 %v558, %v569
          %v575 = vadd.f32 %v559, %v571
          %v576 = vld [vmem:[#allocation4] sm:$0xff]
          %v577 = vld [vmem:[#allocation4 + $0x8] sm:$0xff]
          %v578 = vld [vmem:[#allocation4 + $0x10] sm:$0xff]
          %v579 = vld [vmem:[#allocation4 + $0x18] sm:$0xff]
          %v580 = vsub.f32 %v572, %v576
          %v581 = vsub.f32 %v573, %v577
          %v582 = vsub.f32 %v574, %v578
          %v583 = vsub.f32 %v575, %v579
          %584 = vst.msk [vmem:[%s260] sm:$0xff] %vm440, %v580
          %585 = vst.msk [vmem:[%s260 + $0x8] sm:$0xff] %vm440, %v581
          %586 = vst.msk [vmem:[%s260 + $0x10] sm:$0xff] %vm440, %v582
          %587 = vst.msk [vmem:[%s260 + $0x18] sm:$0xff] %vm440, %v583
        $region52: #{forward.3} parent=31 // pred_fallthru
          _
        %s588 = sand.u32 %s119, 1
        %s589 = scalar_lea.sflag [#allocation7], %s588
        %s590 = sand.u32 %s119, 1
        %s591 = smul.addr %s590, 32
        %s592 = scalar_lea.vmem [#allocation11], %s591
        // Predicated region
        $region53: #{forward.3} parent=31 // pred_check
          %p593 = pneg %p129
        $region54: #{forward.3} parent=31 // pred_check_branch
          %595 = sbr.rel (%p593) target = $region56
        $region55: #{forward.3} parent=31 // pred_region
          %s596 = smul.u32 4, %s25
          %s598 = ssub.s32 512, 512
          %599 = vsyncadd %s589, %s598
          %s600 = smul.addr %s596, 128
          %s601 = scalar_lea.hbm %s3, %s600
          %s602 = sshll.u32 %s592, 4
          %s603 = int_to_ptr.vmem [resolvable:$true] %s602
          %608 = dma.vmem_to_hbm [thread:$0]  %s603, 512, %s601, %s589, 128, 128, 8
        $region56: #{forward.3} parent=31 // pred_fallthru
          _
      $region32: #{forward.3} parent=5 // pred_fallthru
        _
      %p609 = scmp.le.s32.totalorder 2, %s16
      // Predicated region
      $region57: #{forward.3} parent=5 // pred_check
        %p610 = pneg %p609
      $region58: #{forward.3} parent=5 // pred_check_branch
        %612 = sbr.rel (%p610) target = $region60
      $region59: #{forward.3} parent=5 // pred_region
        %s613 = ssub.s32 %s16, 2
        // Predicated region
        $region61: #{forward.3} parent=59 // pred_check
          %p614 = pneg %p135
        $region62: #{forward.3} parent=59 // pred_check_branch
          %616 = sbr.rel (%p614) target = $region64
        $region63: #{forward.3} parent=59 // pred_region
          %s617 = sand.u32 %s120, 1
          %s618 = scalar_lea.sflag [#allocation7], %s617
          %s619 = sand.u32 %s120, 1
          %s620 = smul.addr %s619, 32
          %s621 = scalar_lea.vmem [#allocation11], %s620
          %622 = dma.done %s618, 512
        $region64: #{forward.3} parent=59 // pred_fallthru
          _
      $region60: #{forward.3} parent=5 // pred_fallthru
        _
    $region6: #{forward.3} parent=1 // loop_footer
      %s20 = sadd.s32 1, %s16
    $region7: #{forward.3} parent=1 // loop_footer_branch
      %15 = sbr.rel target = $region3
    $region8: #{forward.3} parent=1 // loop_exit
      _
    %623 = vsyncpa [#allocation6], 1
    %s624 = scalar_lea.sflag [#allocation6], 1
    %625 = vsyncpa %s624, 1
    %626 = vsyncpa [#allocation9], 1
    %627 = vsyncpa [#allocation7], 1
    %s628 = scalar_lea.sflag [#allocation7], 1
    %629 = vsyncpa %s628, 1

</llo_original>
